<compile_context>
chip_gen: v5e
topology: v5e:2x2
jax: 0.10.0
libtpu: 0.0.40
codegen_flags: <defaults>
</compile_context>

<pallas_src>
import functools

import jax
import jax.numpy as jnp
from jax.experimental import pallas as pl
from jax.experimental.pallas import tpu as pltpu


def _round_up(n, m):
    return ((n + m - 1) // m) * m


def _pad2(a, rows, cols):
    return jnp.pad(a, ((0, rows - a.shape[0]), (0, cols - a.shape[1])))


def _default_block_b():
    """Bigger batch tiles on v6e (128 MiB VMEM); 256 elsewhere (v5e default scoped
    limit, v7x 64 MiB VMEM per TensorCore)."""
    try:
        kind = jax.devices()[0].device_kind.lower()
    except Exception:
        return 256
    return 512 if "v6" in kind else 256


def _mlp_kernel(x_ref, w1_ref, wh_ref, w7_ref, b_ref, o_ref, *,
                out_size, h_pad, o_pad):
    """One batch tile: 6x (Linear+ReLU), final Linear, masked LogSoftmax."""

    def _bf16(a):
        return a if a.dtype == jnp.bfloat16 else a.astype(jnp.bfloat16)

    def linear(h_bf16, w, layer, width):
        # bf16 x bf16 -> f32 on the MXU; bias add stays f32 on the VPU.
        acc = jnp.dot(h_bf16, _bf16(w), preferred_element_type=jnp.float32)
        b = b_ref[pl.ds(layer, 1), pl.ds(0, width)]           # (1, width) f32
        return acc + b

    h = _bf16(x_ref[...])                                      # (tb, i_pad) bf16
    h = jnp.maximum(linear(h, w1_ref[...], 0, h_pad), 0.0).astype(jnp.bfloat16)
    for l in range(5):                                         # fc2..fc6, static unroll
        h = jnp.maximum(linear(h, wh_ref[l], l + 1, h_pad), 0.0).astype(jnp.bfloat16)
    logits = linear(h, w7_ref[...], 6, o_pad)                  # (tb, o_pad) f32

    # Padded weight columns / bias lanes are exact zeros -> padded logits are 0.
    # Mask them to a huge negative BEFORE max/exp/sum so they don't corrupt the
    # log-softmax normalizer, while the output store stays lane-dense.
    lane = jax.lax.broadcasted_iota(jnp.int32, logits.shape, 1)
    logits = jnp.where(lane < out_size, logits, jnp.float32(-1e30))

    m = jnp.max(logits, axis=-1, keepdims=True)
    shifted = logits - m
    lse = jnp.log(jnp.sum(jnp.exp(shifted), axis=-1, keepdims=True))
    o_ref[...] = (shifted - lse).astype(o_ref.dtype)           # dense (tb, o_pad) store


def network_phi_forward(x, params, *, block_b=None, weight_dtype=jnp.bfloat16):
    """x: (B, input_size) f32. params: 7 (W[in,out], b[out]) pairs (nn.Linear layout)."""
    B, in_size = x.shape
    hidden = params[1][0].shape[0]
    out_size = params[-1][0].shape[1]

    if block_b is None:
        block_b = _default_block_b()

    # Lane-friendly feature padding.
    i_pad = _round_up(in_size, 128)
    h_pad = _round_up(hidden, 128)
    o_pad = _round_up(out_size, 128)
    c = max(h_pad, o_pad)

    # Balanced batch tiling (bf16 activations -> 16-row sublane granularity).
    b8 = _round_up(max(B, 1), 8)
    if b8 <= 8:
        tb, b_pad = b8, b8                     # tiny batch: single full-array tile
    else:
        b16 = _round_up(B, 16)
        nt = pl.cdiv(b16, block_b)             # balanced tile count at cap block_b
        if nt == 1 and b16 >= 32:
            nt = 2                             # >=2 grid steps -> v7x megacore sharding
        tb = _round_up(pl.cdiv(b16, nt), 16)
        nt = pl.cdiv(b16, tb)
        b_pad = nt * tb

    # Pack / pad parameters: 5 kernel inputs instead of 15.
    x_p = _pad2(x.astype(jnp.bfloat16), b_pad, i_pad)          # streamed, bf16
    w1_p = _pad2(params[0][0], i_pad, h_pad).astype(weight_dtype)
    wh_p = jnp.stack([_pad2(params[l][0], h_pad, h_pad)
                      for l in range(1, 6)]).astype(weight_dtype)
    w7_p = _pad2(params[6][0], h_pad, o_pad).astype(weight_dtype)
    b_p = jnp.concatenate(
        [_pad2(params[l][1].reshape(1, -1).astype(jnp.float32), 1, c)
         for l in range(7)]
        + [jnp.zeros((1, c), jnp.float32)], axis=0)            # (8, c) f32 bias slab

    wbytes = jnp.dtype(weight_dtype).itemsize
    w_elems = i_pad * h_pad + 5 * h_pad * h_pad + h_pad * o_pad
    flops = 2 * b_pad * w_elems
    transcendentals = b_pad * (o_pad + 1)
    bytes_accessed = int(b_pad * i_pad * 2 + w_elems * wbytes + 8 * c * 4
                         + b_pad * o_pad * 4)

    kernel = functools.partial(_mlp_kernel, out_size=out_size,
                               h_pad=h_pad, o_pad=o_pad)
    grid = (b_pad // tb,)

    def build(single_buffer_weights):
        resident_kwargs = (
            {"pipeline_mode": pl.Buffered(1)} if single_buffer_weights else {})
        wbufs = 1 if single_buffer_weights else 2

        vmem_need = ((w_elems * wbytes + 8 * c * 4) * wbufs    # resident params
                     + 2 * tb * i_pad * 2                      # x: bf16, 2 buffers
                     + 2 * tb * o_pad * 4                      # out: f32, 2 buffers
                     + 8 * tb * h_pad * 4)                     # f32 intermediates
        # TODO(synk): if resident weights ever exceed this 64 MiB clamp (very large
        # hidden sizes on v7x), stream the wh stack per layer with pltpu.emit_pipeline
        # instead of keeping all 7 layers VMEM-resident.
        vmem_limit = int(min(max(vmem_need + (8 << 20), 32 << 20), 64 << 20))

        return pl.pallas_call(
            kernel,
            out_shape=jax.ShapeDtypeStruct((b_pad, o_pad), jnp.float32),
            grid=grid,
            in_specs=[
                pl.BlockSpec((tb, i_pad), lambda i: (i, 0)),                 # streamed acts
                pl.BlockSpec((i_pad, h_pad), lambda i: (0, 0), **resident_kwargs),
                pl.BlockSpec((5, h_pad, h_pad), lambda i: (0, 0, 0), **resident_kwargs),
                pl.BlockSpec((h_pad, o_pad), lambda i: (0, 0), **resident_kwargs),
                pl.BlockSpec((8, c), lambda i: (0, 0), **resident_kwargs),   # bias slab
            ],
            out_specs=pl.BlockSpec((tb, o_pad), lambda i: (i, 0)),
            compiler_params=pltpu.CompilerParams(
                dimension_semantics=("parallel",),             # megacore on v7x
                vmem_limit_bytes=vmem_limit),
            cost_estimate=pl.CostEstimate(flops=flops,
                                          transcendentals=transcendentals,
                                          bytes_accessed=bytes_accessed),
        )

    try:
        out = build(True)(x_p, w1_p, wh_p, w7_p, b_p)
    except Exception:
        # Fallback if this jax build rejects pl.Buffered(1): identical semantics,
        # just default double-buffering of the resident params.
        out = build(False)(x_p, w1_p, wh_p, w7_p, b_p)

    return out[:B, :out_size]


def init_params(key, input_size, hidden_size, output_size):
    """Deterministic init mimicking nn.Linear (uniform +-1/sqrt(fan_in))."""
    dims = ([(input_size, hidden_size)] + [(hidden_size, hidden_size)] * 5
            + [(hidden_size, output_size)])
    params = []
    for fan_in, fan_out in dims:
        key, kw, kb = jax.random.split(key, 3)
        bound = 1.0 / (fan_in ** 0.5)
        w = jax.random.uniform(kw, (fan_in, fan_out), jnp.float32, -bound, bound)
        b = jax.random.uniform(kb, (fan_out,), jnp.float32, -bound, bound)
        params.append((w, b))
    return params


def _reference_forward(x, params, weight_dtype=jnp.bfloat16):
    """Pure-JAX reference with the same bf16-dot / f32-accumulate math as the kernel."""
    def wq(w):
        return w.astype(weight_dtype).astype(jnp.bfloat16)

    h = x.astype(jnp.bfloat16)
    for w, b in params[:-1]:
        acc = jnp.dot(h, wq(w), preferred_element_type=jnp.float32)
        h = jnp.maximum(acc + b, 0.0).astype(jnp.bfloat16)
    w, b = params[-1]
    logits = jnp.dot(h, wq(w), preferred_element_type=jnp.float32) + b
    return jax.nn.log_softmax(logits, axis=1)


if __name__ == "__main__":
    key = jax.random.PRNGKey(0)
    batch, input_size, hidden_size, output_size = 8, 16, 32, 2

    key, kx = jax.random.split(key)
    x = jax.random.normal(kx, (batch, input_size), jnp.float32)
    params = init_params(key, input_size, hidden_size, output_size)

    out = network_phi_forward(x, params)
    out = jax.block_until_ready(out)

    ref = _reference_forward(x, params)
    assert out.shape == (batch, output_size)
    assert jnp.allclose(out, ref, atol=2e-4, rtol=2e-4), "mismatch vs reference"

    print("KERNEL_OK")
</pallas_src>

<mosaic_0001>
module attributes {stable_mosaic.version = 11 : i64} {
  func.func @_mlp_kernel(%arg0: i32, %arg1: memref<8x128xbf16, #tpu.memory_space<vmem>>, %arg2: memref<128x128xbf16, #tpu.memory_space<vmem>>, %arg3: memref<5x128x128xbf16, #tpu.memory_space<vmem>>, %arg4: memref<128x128xbf16, #tpu.memory_space<vmem>>, %arg5: memref<8x128xf32, #tpu.memory_space<vmem>>, %arg6: memref<8x128xf32, #tpu.memory_space<vmem>>) attributes {dimension_semantics = [#tpu.dimension_semantics<parallel>], iteration_bounds = array<i64: 1>, scalar_prefetch = 0 : i64, scratch_operands = 0 : i64, tpu.core_type = #tpu.core_type<tc>, window_params = [{transform_indices = @transform_0, window_bounds = array<i64: 8, 128>}, {pipeline_mode = #tpu.pipeline_mode<synchronous>, transform_indices = @transform_1, window_bounds = array<i64: 128, 128>}, {pipeline_mode = #tpu.pipeline_mode<synchronous>, transform_indices = @transform_2, window_bounds = array<i64: 5, 128, 128>}, {pipeline_mode = #tpu.pipeline_mode<synchronous>, transform_indices = @transform_3, window_bounds = array<i64: 128, 128>}, {pipeline_mode = #tpu.pipeline_mode<synchronous>, transform_indices = @transform_4, window_bounds = array<i64: 8, 128>}, {transform_indices = @transform_5, window_bounds = array<i64: 8, 128>}]} {
    %c0 = arith.constant 0 : index
    %c0_0 = arith.constant 0 : index
    %0 = vector.load %arg1[%c0, %c0_0] : memref<8x128xbf16, #tpu.memory_space<vmem>>, vector<8x128xbf16>
    %c0_1 = arith.constant 0 : index
    %c0_2 = arith.constant 0 : index
    %1 = vector.load %arg2[%c0_1, %c0_2] : memref<128x128xbf16, #tpu.memory_space<vmem>>, vector<128x128xbf16>
    %cst = arith.constant dense<0.000000e+00> : vector<8x128xf32>
    %2 = tpu.matmul %0, %1, %cst {dimension_numbers = #tpu.dot_dimension_numbers<[1], [0], [0], [1], [0, 0, 1, 1], [], []>} : vector<8x128xbf16>, vector<128x128xbf16>, vector<8x128xf32> -> vector<8x128xf32>
    %c0_3 = arith.constant 0 : index
    %c0_4 = arith.constant 0 : index
    %3 = vector.load %arg5[%c0_3, %c0_4] : memref<8x128xf32, #tpu.memory_space<vmem>>, vector<1x128xf32>
    %4 = vector.broadcast %3 : vector<1x128xf32> to vector<8x128xf32>
    %5 = arith.addf %2, %4 : vector<8x128xf32>
    %cst_5 = arith.constant 0.000000e+00 : f32
    %6 = vector.broadcast %cst_5 : f32 to vector<8x128xf32>
    %7 = arith.maximumf %5, %6 : vector<8x128xf32>
    %8 = arith.truncf %7 : vector<8x128xf32> to vector<8x128xbf16>
    %c0_6 = arith.constant 0 : index
    %c0_7 = arith.constant 0 : index
    %c0_8 = arith.constant 0 : index
    %9 = vector.load %arg3[%c0_6, %c0_7, %c0_8] : memref<5x128x128xbf16, #tpu.memory_space<vmem>>, vector<1x128x128xbf16>
    %10 = vector.shape_cast %9 : vector<1x128x128xbf16> to vector<128x128xbf16>
    %cst_9 = arith.constant dense<0.000000e+00> : vector<8x128xf32>
    %11 = tpu.matmul %8, %10, %cst_9 {dimension_numbers = #tpu.dot_dimension_numbers<[1], [0], [0], [1], [0, 0, 1, 1], [], []>} : vector<8x128xbf16>, vector<128x128xbf16>, vector<8x128xf32> -> vector<8x128xf32>
    %c1 = arith.constant 1 : index
    %c0_10 = arith.constant 0 : index
    %12 = vector.load %arg5[%c1, %c0_10] : memref<8x128xf32, #tpu.memory_space<vmem>>, vector<1x128xf32>
    %13 = vector.broadcast %12 : vector<1x128xf32> to vector<8x128xf32>
    %14 = arith.addf %11, %13 : vector<8x128xf32>
    %cst_11 = arith.constant 0.000000e+00 : f32
    %15 = vector.broadcast %cst_11 : f32 to vector<8x128xf32>
    %16 = arith.maximumf %14, %15 : vector<8x128xf32>
    %17 = arith.truncf %16 : vector<8x128xf32> to vector<8x128xbf16>
    %c1_12 = arith.constant 1 : index
    %c0_13 = arith.constant 0 : index
    %c0_14 = arith.constant 0 : index
    %18 = vector.load %arg3[%c1_12, %c0_13, %c0_14] : memref<5x128x128xbf16, #tpu.memory_space<vmem>>, vector<1x128x128xbf16>
    %19 = vector.shape_cast %18 : vector<1x128x128xbf16> to vector<128x128xbf16>
    %cst_15 = arith.constant dense<0.000000e+00> : vector<8x128xf32>
    %20 = tpu.matmul %17, %19, %cst_15 {dimension_numbers = #tpu.dot_dimension_numbers<[1], [0], [0], [1], [0, 0, 1, 1], [], []>} : vector<8x128xbf16>, vector<128x128xbf16>, vector<8x128xf32> -> vector<8x128xf32>
    %c2 = arith.constant 2 : index
    %c0_16 = arith.constant 0 : index
    %21 = vector.load %arg5[%c2, %c0_16] : memref<8x128xf32, #tpu.memory_space<vmem>>, vector<1x128xf32>
    %22 = vector.broadcast %21 : vector<1x128xf32> to vector<8x128xf32>
    %23 = arith.addf %20, %22 : vector<8x128xf32>
    %cst_17 = arith.constant 0.000000e+00 : f32
    %24 = vector.broadcast %cst_17 : f32 to vector<8x128xf32>
    %25 = arith.maximumf %23, %24 : vector<8x128xf32>
    %26 = arith.truncf %25 : vector<8x128xf32> to vector<8x128xbf16>
    %c2_18 = arith.constant 2 : index
    %c0_19 = arith.constant 0 : index
    %c0_20 = arith.constant 0 : index
    %27 = vector.load %arg3[%c2_18, %c0_19, %c0_20] : memref<5x128x128xbf16, #tpu.memory_space<vmem>>, vector<1x128x128xbf16>
    %28 = vector.shape_cast %27 : vector<1x128x128xbf16> to vector<128x128xbf16>
    %cst_21 = arith.constant dense<0.000000e+00> : vector<8x128xf32>
    %29 = tpu.matmul %26, %28, %cst_21 {dimension_numbers = #tpu.dot_dimension_numbers<[1], [0], [0], [1], [0, 0, 1, 1], [], []>} : vector<8x128xbf16>, vector<128x128xbf16>, vector<8x128xf32> -> vector<8x128xf32>
    %c3 = arith.constant 3 : index
    %c0_22 = arith.constant 0 : index
    %30 = vector.load %arg5[%c3, %c0_22] : memref<8x128xf32, #tpu.memory_space<vmem>>, vector<1x128xf32>
    %31 = vector.broadcast %30 : vector<1x128xf32> to vector<8x128xf32>
    %32 = arith.addf %29, %31 : vector<8x128xf32>
    %cst_23 = arith.constant 0.000000e+00 : f32
    %33 = vector.broadcast %cst_23 : f32 to vector<8x128xf32>
    %34 = arith.maximumf %32, %33 : vector<8x128xf32>
    %35 = arith.truncf %34 : vector<8x128xf32> to vector<8x128xbf16>
    %c3_24 = arith.constant 3 : index
    %c0_25 = arith.constant 0 : index
    %c0_26 = arith.constant 0 : index
    %36 = vector.load %arg3[%c3_24, %c0_25, %c0_26] : memref<5x128x128xbf16, #tpu.memory_space<vmem>>, vector<1x128x128xbf16>
    %37 = vector.shape_cast %36 : vector<1x128x128xbf16> to vector<128x128xbf16>
    %cst_27 = arith.constant dense<0.000000e+00> : vector<8x128xf32>
    %38 = tpu.matmul %35, %37, %cst_27 {dimension_numbers = #tpu.dot_dimension_numbers<[1], [0], [0], [1], [0, 0, 1, 1], [], []>} : vector<8x128xbf16>, vector<128x128xbf16>, vector<8x128xf32> -> vector<8x128xf32>
    %c4 = arith.constant 4 : index
    %c0_28 = arith.constant 0 : index
    %39 = vector.load %arg5[%c4, %c0_28] : memref<8x128xf32, #tpu.memory_space<vmem>>, vector<1x128xf32>
    %40 = vector.broadcast %39 : vector<1x128xf32> to vector<8x128xf32>
    %41 = arith.addf %38, %40 : vector<8x128xf32>
    %cst_29 = arith.constant 0.000000e+00 : f32
    %42 = vector.broadcast %cst_29 : f32 to vector<8x128xf32>
    %43 = arith.maximumf %41, %42 : vector<8x128xf32>
    %44 = arith.truncf %43 : vector<8x128xf32> to vector<8x128xbf16>
    %c4_30 = arith.constant 4 : index
    %c0_31 = arith.constant 0 : index
    %c0_32 = arith.constant 0 : index
    %45 = vector.load %arg3[%c4_30, %c0_31, %c0_32] : memref<5x128x128xbf16, #tpu.memory_space<vmem>>, vector<1x128x128xbf16>
    %46 = vector.shape_cast %45 : vector<1x128x128xbf16> to vector<128x128xbf16>
    %cst_33 = arith.constant dense<0.000000e+00> : vector<8x128xf32>
    %47 = tpu.matmul %44, %46, %cst_33 {dimension_numbers = #tpu.dot_dimension_numbers<[1], [0], [0], [1], [0, 0, 1, 1], [], []>} : vector<8x128xbf16>, vector<128x128xbf16>, vector<8x128xf32> -> vector<8x128xf32>
    %c5 = arith.constant 5 : index
    %c0_34 = arith.constant 0 : index
    %48 = vector.load %arg5[%c5, %c0_34] : memref<8x128xf32, #tpu.memory_space<vmem>>, vector<1x128xf32>
    %49 = vector.broadcast %48 : vector<1x128xf32> to vector<8x128xf32>
    %50 = arith.addf %47, %49 : vector<8x128xf32>
    %cst_35 = arith.constant 0.000000e+00 : f32
    %51 = vector.broadcast %cst_35 : f32 to vector<8x128xf32>
    %52 = arith.maximumf %50, %51 : vector<8x128xf32>
    %53 = arith.truncf %52 : vector<8x128xf32> to vector<8x128xbf16>
    %c0_36 = arith.constant 0 : index
    %c0_37 = arith.constant 0 : index
    %54 = vector.load %arg4[%c0_36, %c0_37] : memref<128x128xbf16, #tpu.memory_space<vmem>>, vector<128x128xbf16>
    %cst_38 = arith.constant dense<0.000000e+00> : vector<8x128xf32>
    %55 = tpu.matmul %53, %54, %cst_38 {dimension_numbers = #tpu.dot_dimension_numbers<[1], [0], [0], [1], [0, 0, 1, 1], [], []>} : vector<8x128xbf16>, vector<128x128xbf16>, vector<8x128xf32> -> vector<8x128xf32>
    %c6 = arith.constant 6 : index
    %c0_39 = arith.constant 0 : index
    %56 = vector.load %arg5[%c6, %c0_39] : memref<8x128xf32, #tpu.memory_space<vmem>>, vector<1x128xf32>
    %57 = vector.broadcast %56 : vector<1x128xf32> to vector<8x128xf32>
    %58 = arith.addf %55, %57 : vector<8x128xf32>
    %59 = tpu.iota {dimensions = array<i32: 1>} : vector<8x128xi32>
    %c2_i32 = arith.constant 2 : i32
    %60 = vector.broadcast %c2_i32 : i32 to vector<8x128xi32>
    %61 = arith.cmpi slt, %59, %60 : vector<8x128xi32>
    %cst_40 = arith.constant -1.000000e+30 : f32
    %62 = vector.broadcast %cst_40 : f32 to vector<8x128xf32>
    %63 = arith.select %61, %58, %62 : vector<8x128xi1>, vector<8x128xf32>
    %cst_41 = arith.constant dense<0xFF800000> : vector<8xf32>
    %64 = vector.multi_reduction <maximumf>, %63, %cst_41 [1] : vector<8x128xf32> to vector<8xf32>
    %65 = vector.shape_cast %64 : vector<8xf32> to vector<8x1xf32>
    %66 = vector.broadcast %65 : vector<8x1xf32> to vector<8x128xf32>
    %67 = arith.subf %63, %66 : vector<8x128xf32>
    %68 = math.exp %67 : vector<8x128xf32>
    %cst_42 = arith.constant dense<0.000000e+00> : vector<8xf32>
    %69 = vector.multi_reduction <add>, %68, %cst_42 [1] : vector<8x128xf32> to vector<8xf32>
    %70 = vector.shape_cast %69 : vector<8xf32> to vector<8x1xf32>
    %71 = math.log %70 : vector<8x1xf32>
    %72 = vector.broadcast %71 : vector<8x1xf32> to vector<8x128xf32>
    %73 = arith.subf %67, %72 : vector<8x128xf32>
    %c0_43 = arith.constant 0 : index
    %c0_44 = arith.constant 0 : index
    %74 = vector.load %arg6[%c0_43, %c0_44] : memref<8x128xf32, #tpu.memory_space<vmem>>, vector<8x128xf32>
    tpu.vector_store %arg6[%c0_43, %c0_44], %73 {strides = array<i32>} : memref<8x128xf32, #tpu.memory_space<vmem>>, vector<8x128xf32>,
    return
  }
  func.func @transform_0(%arg0: i32) -> (i32, i32) {
    %c0_i32 = arith.constant 0 : i32
    %c0_i32_0 = arith.constant 0 : i32
    return %arg0, %c0_i32 : i32, i32
  }
  func.func @transform_1(%arg0: i32) -> (i32, i32) {
    %c0_i32 = arith.constant 0 : i32
    %c0_i32_0 = arith.constant 0 : i32
    %c0_i32_1 = arith.constant 0 : i32
    return %c0_i32, %c0_i32_0 : i32, i32
  }
  func.func @transform_2(%arg0: i32) -> (i32, i32, i32) {
    %c0_i32 = arith.constant 0 : i32
    %c0_i32_0 = arith.constant 0 : i32
    %c0_i32_1 = arith.constant 0 : i32
    %c0_i32_2 = arith.constant 0 : i32
    return %c0_i32, %c0_i32_0, %c0_i32_1 : i32, i32, i32
  }
  func.func @transform_3(%arg0: i32) -> (i32, i32) {
    %c0_i32 = arith.constant 0 : i32
    %c0_i32_0 = arith.constant 0 : i32
    %c0_i32_1 = arith.constant 0 : i32
    return %c0_i32, %c0_i32_0 : i32, i32
  }
  func.func @transform_4(%arg0: i32) -> (i32, i32) {
    %c0_i32 = arith.constant 0 : i32
    %c0_i32_0 = arith.constant 0 : i32
    %c0_i32_1 = arith.constant 0 : i32
    return %c0_i32, %c0_i32_0 : i32, i32
  }
  func.func @transform_5(%arg0: i32) -> (i32, i32) {
    %c0_i32 = arith.constant 0 : i32
    %c0_i32_0 = arith.constant 0 : i32
    return %arg0, %c0_i32 : i32, i32
  }
}

module attributes {stable_mosaic.version = 11 : i64} {
  func.func @_mlp_kernel(%arg0: i32, %arg1: memref<8x128xbf16, #tpu.memory_space<vmem>>, %arg2: memref<128x128xbf16, #tpu.memory_space<vmem>>, %arg3: memref<5x128x128xbf16, #tpu.memory_space<vmem>>, %arg4: memref<128x128xbf16, #tpu.memory_space<vmem>>, %arg5: memref<8x128xf32, #tpu.memory_space<vmem>>, %arg6: memref<8x128xf32, #tpu.memory_space<vmem>>) attributes {dimension_semantics = [#tpu.dimension_semantics<parallel>], iteration_bounds = array<i64: 1>, scalar_prefetch = 0 : i64, scratch_operands = 0 : i64, tpu.core_type = #tpu.core_type<tc>, window_params = [{transform_indices = @transform_0, window_bounds = array<i64: 8, 128>}, {pipeline_mode = #tpu.pipeline_mode<synchronous>, transform_indices = @transform_1, window_bounds = array<i64: 128, 128>}, {pipeline_mode = #tpu.pipeline_mode<synchronous>, transform_indices = @transform_2, window_bounds = array<i64: 5, 128, 128>}, {pipeline_mode = #tpu.pipeline_mode<synchronous>, transform_indices = @transform_3, window_bounds = array<i64: 128, 128>}, {pipeline_mode = #tpu.pipeline_mode<synchronous>, transform_indices = @transform_4, window_bounds = array<i64: 8, 128>}, {transform_indices = @transform_5, window_bounds = array<i64: 8, 128>}]} {
    %c0 = arith.constant 0 : index
    %c0_0 = arith.constant 0 : index
    %0 = vector.load %arg1[%c0, %c0_0] : memref<8x128xbf16, #tpu.memory_space<vmem>>, vector<8x128xbf16>
    %c0_1 = arith.constant 0 : index
    %c0_2 = arith.constant 0 : index
    %1 = vector.load %arg2[%c0_1, %c0_2] : memref<128x128xbf16, #tpu.memory_space<vmem>>, vector<128x128xbf16>
    %cst = arith.constant dense<0.000000e+00> : vector<8x128xf32>
    %2 = tpu.matmul %0, %1, %cst {dimension_numbers = #tpu.dot_dimension_numbers<[1], [0], [0], [1], [0, 0, 1, 1], [], []>} : vector<8x128xbf16>, vector<128x128xbf16>, vector<8x128xf32> -> vector<8x128xf32>
    %c0_3 = arith.constant 0 : index
    %c0_4 = arith.constant 0 : index
    %3 = vector.load %arg5[%c0_3, %c0_4] : memref<8x128xf32, #tpu.memory_space<vmem>>, vector<1x128xf32>
    %4 = vector.broadcast %3 : vector<1x128xf32> to vector<8x128xf32>
    %5 = arith.addf %2, %4 : vector<8x128xf32>
    %cst_5 = arith.constant 0.000000e+00 : f32
    %6 = vector.broadcast %cst_5 : f32 to vector<8x128xf32>
    %7 = arith.maximumf %5, %6 : vector<8x128xf32>
    %8 = arith.truncf %7 : vector<8x128xf32> to vector<8x128xbf16>
    %c0_6 = arith.constant 0 : index
    %c0_7 = arith.constant 0 : index
    %c0_8 = arith.constant 0 : index
    %9 = vector.load %arg3[%c0_6, %c0_7, %c0_8] : memref<5x128x128xbf16, #tpu.memory_space<vmem>>, vector<1x128x128xbf16>
    %10 = vector.shape_cast %9 : vector<1x128x128xbf16> to vector<128x128xbf16>
    %cst_9 = arith.constant dense<0.000000e+00> : vector<8x128xf32>
    %11 = tpu.matmul %8, %10, %cst_9 {dimension_numbers = #tpu.dot_dimension_numbers<[1], [0], [0], [1], [0, 0, 1, 1], [], []>} : vector<8x128xbf16>, vector<128x128xbf16>, vector<8x128xf32> -> vector<8x128xf32>
    %c1 = arith.constant 1 : index
    %c0_10 = arith.constant 0 : index
    %12 = vector.load %arg5[%c1, %c0_10] : memref<8x128xf32, #tpu.memory_space<vmem>>, vector<1x128xf32>
    %13 = vector.broadcast %12 : vector<1x128xf32> to vector<8x128xf32>
    %14 = arith.addf %11, %13 : vector<8x128xf32>
    %cst_11 = arith.constant 0.000000e+00 : f32
    %15 = vector.broadcast %cst_11 : f32 to vector<8x128xf32>
    %16 = arith.maximumf %14, %15 : vector<8x128xf32>
    %17 = arith.truncf %16 : vector<8x128xf32> to vector<8x128xbf16>
    %c1_12 = arith.constant 1 : index
    %c0_13 = arith.constant 0 : index
    %c0_14 = arith.constant 0 : index
    %18 = vector.load %arg3[%c1_12, %c0_13, %c0_14] : memref<5x128x128xbf16, #tpu.memory_space<vmem>>, vector<1x128x128xbf16>
    %19 = vector.shape_cast %18 : vector<1x128x128xbf16> to vector<128x128xbf16>
    %cst_15 = arith.constant dense<0.000000e+00> : vector<8x128xf32>
    %20 = tpu.matmul %17, %19, %cst_15 {dimension_numbers = #tpu.dot_dimension_numbers<[1], [0], [0], [1], [0, 0, 1, 1], [], []>} : vector<8x128xbf16>, vector<128x128xbf16>, vector<8x128xf32> -> vector<8x128xf32>
    %c2 = arith.constant 2 : index
    %c0_16 = arith.constant 0 : index
    %21 = vector.load %arg5[%c2, %c0_16] : memref<8x128xf32, #tpu.memory_space<vmem>>, vector<1x128xf32>
    %22 = vector.broadcast %21 : vector<1x128xf32> to vector<8x128xf32>
    %23 = arith.addf %20, %22 : vector<8x128xf32>
    %cst_17 = arith.constant 0.000000e+00 : f32
    %24 = vector.broadcast %cst_17 : f32 to vector<8x128xf32>
    %25 = arith.maximumf %23, %24 : vector<8x128xf32>
    %26 = arith.truncf %25 : vector<8x128xf32> to vector<8x128xbf16>
    %c2_18 = arith.constant 2 : index
    %c0_19 = arith.constant 0 : index
    %c0_20 = arith.constant 0 : index
    %27 = vector.load %arg3[%c2_18, %c0_19, %c0_20] : memref<5x128x128xbf16, #tpu.memory_space<vmem>>, vector<1x128x128xbf16>
    %28 = vector.shape_cast %27 : vector<1x128x128xbf16> to vector<128x128xbf16>
    %cst_21 = arith.constant dense<0.000000e+00> : vector<8x128xf32>
    %29 = tpu.matmul %26, %28, %cst_21 {dimension_numbers = #tpu.dot_dimension_numbers<[1], [0], [0], [1], [0, 0, 1, 1], [], []>} : vector<8x128xbf16>, vector<128x128xbf16>, vector<8x128xf32> -> vector<8x128xf32>
    %c3 = arith.constant 3 : index
    %c0_22 = arith.constant 0 : index
    %30 = vector.load %arg5[%c3, %c0_22] : memref<8x128xf32, #tpu.memory_space<vmem>>, vector<1x128xf32>
    %31 = vector.broadcast %30 : vector<1x128xf32> to vector<8x128xf32>
    %32 = arith.addf %29, %31 : vector<8x128xf32>
    %cst_23 = arith.constant 0.000000e+00 : f32
    %33 = vector.broadcast %cst_23 : f32 to vector<8x128xf32>
    %34 = arith.maximumf %32, %33 : vector<8x128xf32>
    %35 = arith.truncf %34 : vector<8x128xf32> to vector<8x128xbf16>
    %c3_24 = arith.constant 3 : index
    %c0_25 = arith.constant 0 : index
    %c0_26 = arith.constant 0 : index
    %36 = vector.load %arg3[%c3_24, %c0_25, %c0_26] : memref<5x128x128xbf16, #tpu.memory_space<vmem>>, vector<1x128x128xbf16>
    %37 = vector.shape_cast %36 : vector<1x128x128xbf16> to vector<128x128xbf16>
    %cst_27 = arith.constant dense<0.000000e+00> : vector<8x128xf32>
    %38 = tpu.matmul %35, %37, %cst_27 {dimension_numbers = #tpu.dot_dimension_numbers<[1], [0], [0], [1], [0, 0, 1, 1], [], []>} : vector<8x128xbf16>, vector<128x128xbf16>, vector<8x128xf32> -> vector<8x128xf32>
    %c4 = arith.constant 4 : index
    %c0_28 = arith.constant 0 : index
    %39 = vector.load %arg5[%c4, %c0_28] : memref<8x128xf32, #tpu.memory_space<vmem>>, vector<1x128xf32>
    %40 = vector.broadcast %39 : vector<1x128xf32> to vector<8x128xf32>
    %41 = arith.addf %38, %40 : vector<8x128xf32>
    %cst_29 = arith.constant 0.000000e+00 : f32
    %42 = vector.broadcast %cst_29 : f32 to vector<8x128xf32>
    %43 = arith.maximumf %41, %42 : vector<8x128xf32>
    %44 = arith.truncf %43 : vector<8x128xf32> to vector<8x128xbf16>
    %c4_30 = arith.constant 4 : index
    %c0_31 = arith.constant 0 : index
    %c0_32 = arith.constant 0 : index
    %45 = vector.load %arg3[%c4_30, %c0_31, %c0_32] : memref<5x128x128xbf16, #tpu.memory_space<vmem>>, vector<1x128x128xbf16>
    %46 = vector.shape_cast %45 : vector<1x128x128xbf16> to vector<128x128xbf16>
    %cst_33 = arith.constant dense<0.000000e+00> : vector<8x128xf32>
    %47 = tpu.matmul %44, %46, %cst_33 {dimension_numbers = #tpu.dot_dimension_numbers<[1], [0], [0], [1], [0, 0, 1, 1], [], []>} : vector<8x128xbf16>, vector<128x128xbf16>, vector<8x128xf32> -> vector<8x128xf32>
    %c5 = arith.constant 5 : index
    %c0_34 = arith.constant 0 : index
    %48 = vector.load %arg5[%c5, %c0_34] : memref<8x128xf32, #tpu.memory_space<vmem>>, vector<1x128xf32>
    %49 = vector.broadcast %48 : vector<1x128xf32> to vector<8x128xf32>
    %50 = arith.addf %47, %49 : vector<8x128xf32>
    %cst_35 = arith.constant 0.000000e+00 : f32
    %51 = vector.broadcast %cst_35 : f32 to vector<8x128xf32>
    %52 = arith.maximumf %50, %51 : vector<8x128xf32>
    %53 = arith.truncf %52 : vector<8x128xf32> to vector<8x128xbf16>
    %c0_36 = arith.constant 0 : index
    %c0_37 = arith.constant 0 : index
    %54 = vector.load %arg4[%c0_36, %c0_37] : memref<128x128xbf16, #tpu.memory_space<vmem>>, vector<128x128xbf16>
    %cst_38 = arith.constant dense<0.000000e+00> : vector<8x128xf32>
    %55 = tpu.matmul %53, %54, %cst_38 {dimension_numbers = #tpu.dot_dimension_numbers<[1], [0], [0], [1], [0, 0, 1, 1], [], []>} : vector<8x128xbf16>, vector<128x128xbf16>, vector<8x128xf32> -> vector<8x128xf32>
    %c6 = arith.constant 6 : index
    %c0_39 = arith.constant 0 : index
    %56 = vector.load %arg5[%c6, %c0_39] : memref<8x128xf32, #tpu.memory_space<vmem>>, vector<1x128xf32>
    %57 = vector.broadcast %56 : vector<1x128xf32> to vector<8x128xf32>
    %58 = arith.addf %55, %57 : vector<8x128xf32>
    %59 = tpu.iota {dimensions = array<i32: 1>} : vector<8x128xi32>
    %c2_i32 = arith.constant 2 : i32
    %60 = vector.broadcast %c2_i32 : i32 to vector<8x128xi32>
    %61 = arith.cmpi slt, %59, %60 : vector<8x128xi32>
    %cst_40 = arith.constant -1.000000e+30 : f32
    %62 = vector.broadcast %cst_40 : f32 to vector<8x128xf32>
    %63 = arith.select %61, %58, %62 : vector<8x128xi1>, vector<8x128xf32>
    %cst_41 = arith.constant dense<0xFF800000> : vector<8xf32>
    %64 = vector.multi_reduction <maximumf>, %63, %cst_41 [1] : vector<8x128xf32> to vector<8xf32>
    %65 = vector.shape_cast %64 : vector<8xf32> to vector<8x1xf32>
    %66 = vector.broadcast %65 : vector<8x1xf32> to vector<8x128xf32>
    %67 = arith.subf %63, %66 : vector<8x128xf32>
    %68 = math.exp %67 : vector<8x128xf32>
    %cst_42 = arith.constant dense<0.000000e+00> : vector<8xf32>
    %69 = vector.multi_reduction <add>, %68, %cst_42 [1] : vector<8x128xf32> to vector<8xf32>
    %70 = vector.shape_cast %69 : vector<8xf32> to vector<8x1xf32>
    %71 = math.log %70 : vector<8x1xf32>
    %72 = vector.broadcast %71 : vector<8x1xf32> to vector<8x128xf32>
    %73 = arith.subf %67, %72 : vector<8x128xf32>
    %c0_43 = arith.constant 0 : index
    %c0_44 = arith.constant 0 : index
    %74 = vector.load %arg6[%c0_43, %c0_44] : memref<8x128xf32, #tpu.memory_space<vmem>>, vector<8x128xf32>
    tpu.vector_store %arg6[%c0_43, %c0_44], %73 {strides = array<i32>} : memref<8x128xf32, #tpu.memory_space<vmem>>, vector<8x128xf32>,
    return
  }
  func.func @transform_0(%arg0: i32) -> (i32, i32) {
    %c0_i32 = arith.constant 0 : i32
    %c0_i32_0 = arith.constant 0 : i32
    return %arg0, %c0_i32 : i32, i32
  }
  func.func @transform_1(%arg0: i32) -> (i32, i32) {
    %c0_i32 = arith.constant 0 : i32
    %c0_i32_0 = arith.constant 0 : i32
    %c0_i32_1 = arith.constant 0 : i32
    return %c0_i32, %c0_i32_0 : i32, i32
  }
  func.func @transform_2(%arg0: i32) -> (i32, i32, i32) {
    %c0_i32 = arith.constant 0 : i32
    %c0_i32_0 = arith.constant 0 : i32
    %c0_i32_1 = arith.constant 0 : i32
    %c0_i32_2 = arith.constant 0 : i32
    return %c0_i32, %c0_i32_0, %c0_i32_1 : i32, i32, i32
  }
  func.func @transform_3(%arg0: i32) -> (i32, i32) {
    %c0_i32 = arith.constant 0 : i32
    %c0_i32_0 = arith.constant 0 : i32
    %c0_i32_1 = arith.constant 0 : i32
    return %c0_i32, %c0_i32_0 : i32, i32
  }
  func.func @transform_4(%arg0: i32) -> (i32, i32) {
    %c0_i32 = arith.constant 0 : i32
    %c0_i32_0 = arith.constant 0 : i32
    %c0_i32_1 = arith.constant 0 : i32
    return %c0_i32, %c0_i32_0 : i32, i32
  }
  func.func @transform_5(%arg0: i32) -> (i32, i32) {
    %c0_i32 = arith.constant 0 : i32
    %c0_i32_0 = arith.constant 0 : i32
    return %arg0, %c0_i32 : i32, i32
  }
}

</mosaic_0001>

<llo_original>
// kernel: tpu_custom_call.1
$region0: #{tpu_custom_call.1}
  #allocation0 [shape = 'u32[]', space=smem, size = 0x4, offset = 0x4, fixed_abs, tag = 'smem constant byte address 0x4 - core index']
  #allocation1 [shape = 'u32[72,128]{1,0:T(1,128)}', space=vmem, size = 0x9000, scoped, tag = 'internal scratch']
  %s0 = inlined_call_operand.hbm [shape: bf16[8,128], index: 0, kind: input, shape index: {}]
  %s1 = inlined_call_operand.hbm [shape: bf16[128,128], index: 1, kind: input, shape index: {}]
  %s2 = inlined_call_operand.hbm [shape: bf16[5,128,128], index: 2, kind: input, shape index: {}]
  %s3 = inlined_call_operand.hbm [shape: bf16[128,128], index: 3, kind: input, shape index: {}]
  %s4 = inlined_call_operand.hbm [shape: f32[8,128], index: 4, kind: input, shape index: {}]
  %s5 = inlined_call_operand.hbm [shape: f32[8,128], index: 5, kind: output, shape index: {}]
  %s6 = sld [smem:[#allocation0]]
  $region50: #{tpu_custom_call.1} parent=0
    _
  %s8 = ssub.s32 1, %s6
  %s9 = scalar_select 0, %s8, %s6
  $region1: #{tpu_custom_call.1} parent=0
    #allocation2 [shape = 'u8[2048]{0}', space=vmem, size = 0x800, scoped, tag = 'input window, operand 0, single buffered']
    #allocation3 [shape = 's32[1]{0}', space=sflag, size = 0x4, scoped, tag = 'scoped memory for tpu_custom_call.1']
    #allocation4 [shape = 's32[1]{0}', space=sflag, size = 0x4, scoped, tag = 'scoped memory for tpu_custom_call.1']
    #allocation5 [shape = 'u8[32768]{0}', space=vmem, size = 0x8000, scoped, tag = 'input window, operand 1, single buffered']
    #allocation6 [shape = 's32[1]{0}', space=sflag, size = 0x4, scoped, tag = 'scoped memory for tpu_custom_call.1']
    #allocation7 [shape = 'u8[163840]{0}', space=vmem, size = 0x28000, scoped, tag = 'input window, operand 2, single buffered']
    #allocation8 [shape = 'u8[32768]{0}', space=vmem, size = 0x8000, scoped, tag = 'input window, operand 3, single buffered']
    #allocation9 [shape = 's32[1]{0}', space=sflag, size = 0x4, scoped, tag = 'scoped memory for tpu_custom_call.1']
    #allocation10 [shape = 'u8[4096]{0}', space=vmem, size = 0x1000, scoped, tag = 'input window, operand 4, single buffered']
    #allocation11 [shape = 'u8[4096]{0}', space=vmem, size = 0x1000, scoped, tag = 'output window, operand 0, single buffered']
    %10 = vsyncpa [#allocation3], 0
    %11 = vsyncpa [#allocation6], 0
    %12 = vsyncpa [#allocation9], 0
    %13 = vsyncpa [#allocation4], 0
    // Predicated region
    $region2: #{tpu_custom_call.1} parent=1 // pred_check
      _
    $region3: #{tpu_custom_call.1} parent=1 // pred_check_branch
      %15 = sbr.rel (0) target = $region5
    $region4: #{tpu_custom_call.1} parent=1 // pred_region
      %17 = vsyncadd [#allocation3], 0
      %s19 = sshll.u32 %s0, 4
      %s20 = int_to_ptr.hbm [resolvable:$true] %s19
      %s21 = sshll.u32 [#allocation2], 4
      %s22 = int_to_ptr.vmem [resolvable:$true] %s21
      %24 = dma.hbm_to_vmem [thread:$0]  %s20, 64, %s22, [#allocation3]
    $region5: #{tpu_custom_call.1} parent=1 // pred_fallthru
      _
    // Predicated region
    $region6: #{tpu_custom_call.1} parent=1 // pred_check
      _
    $region7: #{tpu_custom_call.1} parent=1 // pred_check_branch
      %26 = sbr.rel (0) target = $region9
    $region8: #{tpu_custom_call.1} parent=1 // pred_region
      %28 = vsyncadd [#allocation6], 0
      %s29 = sshll.u32 %s1, 4
      %s30 = int_to_ptr.hbm [resolvable:$true] %s29
      %s31 = sshll.u32 [#allocation5], 4
      %s32 = int_to_ptr.vmem [resolvable:$true] %s31
      %37 = dma.hbm_to_vmem [thread:$0]  %s30, 1024, %s32, [#allocation6], 64, 64, 4
    $region9: #{tpu_custom_call.1} parent=1 // pred_fallthru
      _
    // Predicated region
    $region10: #{tpu_custom_call.1} parent=1 // pred_check
      _
    $region11: #{tpu_custom_call.1} parent=1 // pred_check_branch
      %39 = sbr.rel (0) target = $region13
    $region12: #{tpu_custom_call.1} parent=1 // pred_region
      %41 = vsyncadd [#allocation6], 0
      %s42 = sshll.u32 %s2, 4
      %s43 = int_to_ptr.hbm [resolvable:$true] %s42
      %s44 = sshll.u32 [#allocation7], 4
      %s45 = int_to_ptr.vmem [resolvable:$true] %s44
      %50 = dma.hbm_to_vmem [thread:$0]  %s43, 5120, %s45, [#allocation6], 64, 64, 4
    $region13: #{tpu_custom_call.1} parent=1 // pred_fallthru
      _
    // Predicated region
    $region14: #{tpu_custom_call.1} parent=1 // pred_check
      _
    $region15: #{tpu_custom_call.1} parent=1 // pred_check_branch
      %52 = sbr.rel (0) target = $region17
    $region16: #{tpu_custom_call.1} parent=1 // pred_region
      %54 = vsyncadd [#allocation9], 0
      %s55 = sshll.u32 %s3, 4
      %s56 = int_to_ptr.hbm [resolvable:$true] %s55
      %s57 = sshll.u32 [#allocation8], 4
      %s58 = int_to_ptr.vmem [resolvable:$true] %s57
      %63 = dma.hbm_to_vmem [thread:$0]  %s56, 1024, %s58, [#allocation9], 64, 64, 4
    $region17: #{tpu_custom_call.1} parent=1 // pred_fallthru
      _
    // Predicated region
    $region18: #{tpu_custom_call.1} parent=1 // pred_check
      _
    $region19: #{tpu_custom_call.1} parent=1 // pred_check_branch
      %65 = sbr.rel (0) target = $region21
    $region20: #{tpu_custom_call.1} parent=1 // pred_region
      %67 = vsyncadd [#allocation9], 0
      %s69 = sshll.u32 %s4, 4
      %s70 = int_to_ptr.hbm [resolvable:$true] %s69
      %s71 = sshll.u32 [#allocation10], 4
      %s72 = int_to_ptr.vmem [resolvable:$true] %s71
      %74 = dma.hbm_to_vmem [thread:$0]  %s70, 128, %s72, [#allocation9]
    $region21: #{tpu_custom_call.1} parent=1 // pred_fallthru
      _
    // Predicated region
    $region22: #{tpu_custom_call.1} parent=1 // pred_check
      _
    $region23: #{tpu_custom_call.1} parent=1 // pred_check_branch
      %76 = sbr.rel (0) target = $region25
    $region24: #{tpu_custom_call.1} parent=1 // pred_region
      %78 = dma.done [#allocation3], 64
    $region25: #{tpu_custom_call.1} parent=1 // pred_fallthru
      _
    // Predicated region
    $region26: #{tpu_custom_call.1} parent=1 // pred_check
      _
    $region27: #{tpu_custom_call.1} parent=1 // pred_check_branch
      %80 = sbr.rel (0) target = $region29
    $region28: #{tpu_custom_call.1} parent=1 // pred_region
      %82 = dma.done [#allocation6], 1024
    $region29: #{tpu_custom_call.1} parent=1 // pred_fallthru
      _
    // Predicated region
    $region30: #{tpu_custom_call.1} parent=1 // pred_check
      _
    $region31: #{tpu_custom_call.1} parent=1 // pred_check_branch
      %84 = sbr.rel (0) target = $region33
    $region32: #{tpu_custom_call.1} parent=1 // pred_region
      %86 = dma.done [#allocation6], 5120
    $region33: #{tpu_custom_call.1} parent=1 // pred_fallthru
      _
    // Predicated region
    $region34: #{tpu_custom_call.1} parent=1 // pred_check
      _
    $region35: #{tpu_custom_call.1} parent=1 // pred_check_branch
      %88 = sbr.rel (0) target = $region37
    $region36: #{tpu_custom_call.1} parent=1 // pred_region
      %90 = dma.done [#allocation9], 1024
    $region37: #{tpu_custom_call.1} parent=1 // pred_fallthru
      _
    // Predicated region
    $region38: #{tpu_custom_call.1} parent=1 // pred_check
      _
    $region39: #{tpu_custom_call.1} parent=1 // pred_check_branch
      %92 = sbr.rel (0) target = $region41
    $region40: #{tpu_custom_call.1} parent=1 // pred_region
      %94 = dma.done [#allocation9], 128
    $region41: #{tpu_custom_call.1} parent=1 // pred_fallthru
      _
    %v95 = vld [vmem:[#allocation2] sm:$0xf]
    %v96 = vld [vmem:[#allocation5] sm:$0xf]
    %v97 = vld [vmem:[#allocation5 + $0x4] sm:$0xf]
    %v98 = vld [vmem:[#allocation5 + $0x8] sm:$0xf]
    %v99 = vld [vmem:[#allocation5 + $0xc] sm:$0xf]
    %v100 = vld [vmem:[#allocation5 + $0x10] sm:$0xf]
    %v101 = vld [vmem:[#allocation5 + $0x14] sm:$0xf]
    %v102 = vld [vmem:[#allocation5 + $0x18] sm:$0xf]
    %v103 = vld [vmem:[#allocation5 + $0x1c] sm:$0xf]
    %v104 = vld [vmem:[#allocation5 + $0x20] sm:$0xf]
    %v105 = vld [vmem:[#allocation5 + $0x24] sm:$0xf]
    %v106 = vld [vmem:[#allocation5 + $0x28] sm:$0xf]
    %v107 = vld [vmem:[#allocation5 + $0x2c] sm:$0xf]
    %v108 = vld [vmem:[#allocation5 + $0x30] sm:$0xf]
    %v109 = vld [vmem:[#allocation5 + $0x34] sm:$0xf]
    %v110 = vld [vmem:[#allocation5 + $0x38] sm:$0xf]
    %v111 = vld [vmem:[#allocation5 + $0x3c] sm:$0xf]
    %v112 = vld [vmem:[#allocation10] sm:$0x1]
    %v113 = vperm.slane %v112, 0
    %v130 = vunpack.c.l.b16 %v96
    %v131 = vunpack.c.l.b16 %v97
    %v132 = vunpack.c.l.b16 %v98
    %v133 = vunpack.c.l.b16 %v99
    %v134 = vunpack.c.l.b16 %v100
    %v135 = vunpack.c.l.b16 %v101
    %v136 = vunpack.c.l.b16 %v102
    %v137 = vunpack.c.l.b16 %v103
    %v138 = vunpack.c.l.b16 %v104
    %v139 = vunpack.c.l.b16 %v105
    %v140 = vunpack.c.l.b16 %v106
    %v141 = vunpack.c.l.b16 %v107
    %v142 = vunpack.c.l.b16 %v108
    %v143 = vunpack.c.l.b16 %v109
    %v144 = vunpack.c.l.b16 %v110
    %v145 = vunpack.c.l.b16 %v111
    %v146 = vpack.c.b16 %v131, %v130
    %v147 = vpack.c.b16 %v133, %v132
    %v148 = vpack.c.b16 %v135, %v134
    %v149 = vpack.c.b16 %v137, %v136
    %v150 = vpack.c.b16 %v139, %v138
    %v151 = vpack.c.b16 %v141, %v140
    %v152 = vpack.c.b16 %v143, %v142
    %v153 = vpack.c.b16 %v145, %v144
    %162 = vmatpush.bf16.msra.mxu0 %v153
    %163 = vmatpush.bf16.msra.mxu0 %v152
    %164 = vmatpush.bf16.msra.mxu0 %v151
    %165 = vmatpush.bf16.msra.mxu0 %v150
    %166 = vmatpush.bf16.msra.mxu0 %v149
    %167 = vmatpush.bf16.msra.mxu0 %v148
    %168 = vmatpush.bf16.msra.mxu0 %v147
    %169 = vmatpush.bf16.msra.mxu0 %v146
    %170 = vmatmul.bf16.gmra.mxu0 %v95
    %v171 = vpop.f32.mrf.mxu0
    %v172 = vadd.f32 %v113, %v171
    %v173 = vpop.f32.mrf.mxu0
    %174 = vdwg.mxu0
    %v175 = vmax.f32 %v172, 0.0
    %v176 = vpack.c.bf16 %v175, %v175
    %v177 = vld [vmem:[#allocation7] sm:$0xf]
    %v178 = vld [vmem:[#allocation7 + $0x4] sm:$0xf]
    %v179 = vld [vmem:[#allocation7 + $0x8] sm:$0xf]
    %v180 = vld [vmem:[#allocation7 + $0xc] sm:$0xf]
    %v181 = vld [vmem:[#allocation7 + $0x10] sm:$0xf]
    %v182 = vld [vmem:[#allocation7 + $0x14] sm:$0xf]
    %v183 = vld [vmem:[#allocation7 + $0x18] sm:$0xf]
    %v184 = vld [vmem:[#allocation7 + $0x1c] sm:$0xf]
    %v185 = vld [vmem:[#allocation7 + $0x20] sm:$0xf]
    %v186 = vld [vmem:[#allocation7 + $0x24] sm:$0xf]
    %v187 = vld [vmem:[#allocation7 + $0x28] sm:$0xf]
    %v188 = vld [vmem:[#allocation7 + $0x2c] sm:$0xf]
    %v189 = vld [vmem:[#allocation7 + $0x30] sm:$0xf]
    %v190 = vld [vmem:[#allocation7 + $0x34] sm:$0xf]
    %v191 = vld [vmem:[#allocation7 + $0x38] sm:$0xf]
    %v192 = vld [vmem:[#allocation7 + $0x3c] sm:$0xf]
    %v193 = vld [vmem:[#allocation10 + $0x1] sm:$0x1]
    %v194 = vperm.slane %v193, 0
    %v211 = vunpack.c.l.b16 %v177
    %v212 = vunpack.c.l.b16 %v178
    %v213 = vunpack.c.l.b16 %v179
    %v214 = vunpack.c.l.b16 %v180
    %v215 = vunpack.c.l.b16 %v181
    %v216 = vunpack.c.l.b16 %v182
    %v217 = vunpack.c.l.b16 %v183
    %v218 = vunpack.c.l.b16 %v184
    %v219 = vunpack.c.l.b16 %v185
    %v220 = vunpack.c.l.b16 %v186
    %v221 = vunpack.c.l.b16 %v187
    %v222 = vunpack.c.l.b16 %v188
    %v223 = vunpack.c.l.b16 %v189
    %v224 = vunpack.c.l.b16 %v190
    %v225 = vunpack.c.l.b16 %v191
    %v226 = vunpack.c.l.b16 %v192
    %v227 = vpack.c.b16 %v212, %v211
    %v228 = vpack.c.b16 %v214, %v213
    %v229 = vpack.c.b16 %v216, %v215
    %v230 = vpack.c.b16 %v218, %v217
    %v231 = vpack.c.b16 %v220, %v219
    %v232 = vpack.c.b16 %v222, %v221
    %v233 = vpack.c.b16 %v224, %v223
    %v234 = vpack.c.b16 %v226, %v225
    %243 = vmatpush.bf16.msra.mxu0 %v234
    %244 = vmatpush.bf16.msra.mxu0 %v233
    %245 = vmatpush.bf16.msra.mxu0 %v232
    %246 = vmatpush.bf16.msra.mxu0 %v231
    %247 = vmatpush.bf16.msra.mxu0 %v230
    %248 = vmatpush.bf16.msra.mxu0 %v229
    %249 = vmatpush.bf16.msra.mxu0 %v228
    %250 = vmatpush.bf16.msra.mxu0 %v227
    %251 = vmatmul.bf16.gmra.mxu0 %v176
    %v252 = vpop.f32.mrf.mxu0
    %v253 = vadd.f32 %v194, %v252
    %v254 = vpop.f32.mrf.mxu0
    %255 = vdwg.mxu0
    %v256 = vmax.f32 %v253, 0.0
    %v257 = vpack.c.bf16 %v256, %v256
    %s258 = scalar_lea.vmem [#allocation7], 64
    %v259 = vld [vmem:[%s258] sm:$0xf]
    %v260 = vld [vmem:[%s258 + $0x4] sm:$0xf]
    %v261 = vld [vmem:[%s258 + $0x8] sm:$0xf]
    %v262 = vld [vmem:[%s258 + $0xc] sm:$0xf]
    %v263 = vld [vmem:[%s258 + $0x10] sm:$0xf]
    %v264 = vld [vmem:[%s258 + $0x14] sm:$0xf]
    %v265 = vld [vmem:[%s258 + $0x18] sm:$0xf]
    %v266 = vld [vmem:[%s258 + $0x1c] sm:$0xf]
    %v267 = vld [vmem:[%s258 + $0x20] sm:$0xf]
    %v268 = vld [vmem:[%s258 + $0x24] sm:$0xf]
    %v269 = vld [vmem:[%s258 + $0x28] sm:$0xf]
    %v270 = vld [vmem:[%s258 + $0x2c] sm:$0xf]
    %v271 = vld [vmem:[%s258 + $0x30] sm:$0xf]
    %v272 = vld [vmem:[%s258 + $0x34] sm:$0xf]
    %v273 = vld [vmem:[%s258 + $0x38] sm:$0xf]
    %v274 = vld [vmem:[%s258 + $0x3c] sm:$0xf]
    %v275 = vld [vmem:[#allocation10 + $0x2] sm:$0x1]
    %v276 = vperm.slane %v275, 0
    %v293 = vunpack.c.l.b16 %v259
    %v294 = vunpack.c.l.b16 %v260
    %v295 = vunpack.c.l.b16 %v261
    %v296 = vunpack.c.l.b16 %v262
    %v297 = vunpack.c.l.b16 %v263
    %v298 = vunpack.c.l.b16 %v264
    %v299 = vunpack.c.l.b16 %v265
    %v300 = vunpack.c.l.b16 %v266
    %v301 = vunpack.c.l.b16 %v267
    %v302 = vunpack.c.l.b16 %v268
    %v303 = vunpack.c.l.b16 %v269
    %v304 = vunpack.c.l.b16 %v270
    %v305 = vunpack.c.l.b16 %v271
    %v306 = vunpack.c.l.b16 %v272
    %v307 = vunpack.c.l.b16 %v273
    %v308 = vunpack.c.l.b16 %v274
    %v309 = vpack.c.b16 %v294, %v293
    %v310 = vpack.c.b16 %v296, %v295
    %v311 = vpack.c.b16 %v298, %v297
    %v312 = vpack.c.b16 %v300, %v299
    %v313 = vpack.c.b16 %v302, %v301
    %v314 = vpack.c.b16 %v304, %v303
    %v315 = vpack.c.b16 %v306, %v305
    %v316 = vpack.c.b16 %v308, %v307
    %325 = vmatpush.bf16.msra.mxu0 %v316
    %326 = vmatpush.bf16.msra.mxu0 %v315
    %327 = vmatpush.bf16.msra.mxu0 %v314
    %328 = vmatpush.bf16.msra.mxu0 %v313
    %329 = vmatpush.bf16.msra.mxu0 %v312
    %330 = vmatpush.bf16.msra.mxu0 %v311
    %331 = vmatpush.bf16.msra.mxu0 %v310
    %332 = vmatpush.bf16.msra.mxu0 %v309
    %333 = vmatmul.bf16.gmra.mxu0 %v257
    %v334 = vpop.f32.mrf.mxu0
    %v335 = vadd.f32 %v276, %v334
    %v336 = vpop.f32.mrf.mxu0
    %337 = vdwg.mxu0
    %v338 = vmax.f32 %v335, 0.0
    %v339 = vpack.c.bf16 %v338, %v338
    %s340 = scalar_lea.vmem [#allocation7], 128
    %v341 = vld [vmem:[%s340] sm:$0xf]
    %v342 = vld [vmem:[%s340 + $0x4] sm:$0xf]
    %v343 = vld [vmem:[%s340 + $0x8] sm:$0xf]
    %v344 = vld [vmem:[%s340 + $0xc] sm:$0xf]
    %v345 = vld [vmem:[%s340 + $0x10] sm:$0xf]
    %v346 = vld [vmem:[%s340 + $0x14] sm:$0xf]
    %v347 = vld [vmem:[%s340 + $0x18] sm:$0xf]
    %v348 = vld [vmem:[%s340 + $0x1c] sm:$0xf]
    %v349 = vld [vmem:[%s340 + $0x20] sm:$0xf]
    %v350 = vld [vmem:[%s340 + $0x24] sm:$0xf]
    %v351 = vld [vmem:[%s340 + $0x28] sm:$0xf]
    %v352 = vld [vmem:[%s340 + $0x2c] sm:$0xf]
    %v353 = vld [vmem:[%s340 + $0x30] sm:$0xf]
    %v354 = vld [vmem:[%s340 + $0x34] sm:$0xf]
    %v355 = vld [vmem:[%s340 + $0x38] sm:$0xf]
    %v356 = vld [vmem:[%s340 + $0x3c] sm:$0xf]
    %v357 = vld [vmem:[#allocation10 + $0x3] sm:$0x1]
    %v358 = vperm.slane %v357, 0
    %v375 = vunpack.c.l.b16 %v341
    %v376 = vunpack.c.l.b16 %v342
    %v377 = vunpack.c.l.b16 %v343
    %v378 = vunpack.c.l.b16 %v344
    %v379 = vunpack.c.l.b16 %v345
    %v380 = vunpack.c.l.b16 %v346
    %v381 = vunpack.c.l.b16 %v347
    %v382 = vunpack.c.l.b16 %v348
    %v383 = vunpack.c.l.b16 %v349
    %v384 = vunpack.c.l.b16 %v350
    %v385 = vunpack.c.l.b16 %v351
    %v386 = vunpack.c.l.b16 %v352
    %v387 = vunpack.c.l.b16 %v353
    %v388 = vunpack.c.l.b16 %v354
    %v389 = vunpack.c.l.b16 %v355
    %v390 = vunpack.c.l.b16 %v356
    %v391 = vpack.c.b16 %v376, %v375
    %v392 = vpack.c.b16 %v378, %v377
    %v393 = vpack.c.b16 %v380, %v379
    %v394 = vpack.c.b16 %v382, %v381
    %v395 = vpack.c.b16 %v384, %v383
    %v396 = vpack.c.b16 %v386, %v385
    %v397 = vpack.c.b16 %v388, %v387
    %v398 = vpack.c.b16 %v390, %v389
    %407 = vmatpush.bf16.msra.mxu0 %v398
    %408 = vmatpush.bf16.msra.mxu0 %v397
    %409 = vmatpush.bf16.msra.mxu0 %v396
    %410 = vmatpush.bf16.msra.mxu0 %v395
    %411 = vmatpush.bf16.msra.mxu0 %v394
    %412 = vmatpush.bf16.msra.mxu0 %v393
    %413 = vmatpush.bf16.msra.mxu0 %v392
    %414 = vmatpush.bf16.msra.mxu0 %v391
    %415 = vmatmul.bf16.gmra.mxu0 %v339
    %v416 = vpop.f32.mrf.mxu0
    %v417 = vadd.f32 %v358, %v416
    %v418 = vpop.f32.mrf.mxu0
    %419 = vdwg.mxu0
    %v420 = vmax.f32 %v417, 0.0
    %v421 = vpack.c.bf16 %v420, %v420
    %s422 = scalar_lea.vmem [#allocation7], 192
    %v423 = vld [vmem:[%s422] sm:$0xf]
    %v424 = vld [vmem:[%s422 + $0x4] sm:$0xf]
    %v425 = vld [vmem:[%s422 + $0x8] sm:$0xf]
    %v426 = vld [vmem:[%s422 + $0xc] sm:$0xf]
    %v427 = vld [vmem:[%s422 + $0x10] sm:$0xf]
    %v428 = vld [vmem:[%s422 + $0x14] sm:$0xf]
    %v429 = vld [vmem:[%s422 + $0x18] sm:$0xf]
    %v430 = vld [vmem:[%s422 + $0x1c] sm:$0xf]
    %v431 = vld [vmem:[%s422 + $0x20] sm:$0xf]
    %v432 = vld [vmem:[%s422 + $0x24] sm:$0xf]
    %v433 = vld [vmem:[%s422 + $0x28] sm:$0xf]
    %v434 = vld [vmem:[%s422 + $0x2c] sm:$0xf]
    %v435 = vld [vmem:[%s422 + $0x30] sm:$0xf]
    %v436 = vld [vmem:[%s422 + $0x34] sm:$0xf]
    %v437 = vld [vmem:[%s422 + $0x38] sm:$0xf]
    %v438 = vld [vmem:[%s422 + $0x3c] sm:$0xf]
    %v439 = vld [vmem:[#allocation10 + $0x4] sm:$0x1]
    %v440 = vperm.slane %v439, 0
    %v457 = vunpack.c.l.b16 %v423
    %v458 = vunpack.c.l.b16 %v424
    %v459 = vunpack.c.l.b16 %v425
    %v460 = vunpack.c.l.b16 %v426
    %v461 = vunpack.c.l.b16 %v427
    %v462 = vunpack.c.l.b16 %v428
    %v463 = vunpack.c.l.b16 %v429
    %v464 = vunpack.c.l.b16 %v430
    %v465 = vunpack.c.l.b16 %v431
    %v466 = vunpack.c.l.b16 %v432
    %v467 = vunpack.c.l.b16 %v433
    %v468 = vunpack.c.l.b16 %v434
    %v469 = vunpack.c.l.b16 %v435
    %v470 = vunpack.c.l.b16 %v436
    %v471 = vunpack.c.l.b16 %v437
    %v472 = vunpack.c.l.b16 %v438
    %v473 = vpack.c.b16 %v458, %v457
    %v474 = vpack.c.b16 %v460, %v459
    %v475 = vpack.c.b16 %v462, %v461
    %v476 = vpack.c.b16 %v464, %v463
    %v477 = vpack.c.b16 %v466, %v465
    %v478 = vpack.c.b16 %v468, %v467
    %v479 = vpack.c.b16 %v470, %v469
    %v480 = vpack.c.b16 %v472, %v471
    %489 = vmatpush.bf16.msra.mxu0 %v480
    %490 = vmatpush.bf16.msra.mxu0 %v479
    %491 = vmatpush.bf16.msra.mxu0 %v478
    %492 = vmatpush.bf16.msra.mxu0 %v477
    %493 = vmatpush.bf16.msra.mxu0 %v476
    %494 = vmatpush.bf16.msra.mxu0 %v475
    %495 = vmatpush.bf16.msra.mxu0 %v474
    %496 = vmatpush.bf16.msra.mxu0 %v473
    %497 = vmatmul.bf16.gmra.mxu0 %v421
    %v498 = vpop.f32.mrf.mxu0
    %v499 = vadd.f32 %v440, %v498
    %v500 = vpop.f32.mrf.mxu0
    %501 = vdwg.mxu0
    %v502 = vmax.f32 %v499, 0.0
    %v503 = vpack.c.bf16 %v502, %v502
    %s504 = scalar_lea.vmem [#allocation7], 256
    %v505 = vld [vmem:[%s504] sm:$0xf]
    %v506 = vld [vmem:[%s504 + $0x4] sm:$0xf]
    %v507 = vld [vmem:[%s504 + $0x8] sm:$0xf]
    %v508 = vld [vmem:[%s504 + $0xc] sm:$0xf]
    %v509 = vld [vmem:[%s504 + $0x10] sm:$0xf]
    %v510 = vld [vmem:[%s504 + $0x14] sm:$0xf]
    %v511 = vld [vmem:[%s504 + $0x18] sm:$0xf]
    %v512 = vld [vmem:[%s504 + $0x1c] sm:$0xf]
    %v513 = vld [vmem:[%s504 + $0x20] sm:$0xf]
    %v514 = vld [vmem:[%s504 + $0x24] sm:$0xf]
    %v515 = vld [vmem:[%s504 + $0x28] sm:$0xf]
    %v516 = vld [vmem:[%s504 + $0x2c] sm:$0xf]
    %v517 = vld [vmem:[%s504 + $0x30] sm:$0xf]
    %v518 = vld [vmem:[%s504 + $0x34] sm:$0xf]
    %v519 = vld [vmem:[%s504 + $0x38] sm:$0xf]
    %v520 = vld [vmem:[%s504 + $0x3c] sm:$0xf]
    %v521 = vld [vmem:[#allocation10 + $0x5] sm:$0x1]
    %v522 = vperm.slane %v521, 0
    %v539 = vunpack.c.l.b16 %v505
    %v540 = vunpack.c.l.b16 %v506
    %v541 = vunpack.c.l.b16 %v507
    %v542 = vunpack.c.l.b16 %v508
    %v543 = vunpack.c.l.b16 %v509
    %v544 = vunpack.c.l.b16 %v510
    %v545 = vunpack.c.l.b16 %v511
    %v546 = vunpack.c.l.b16 %v512
    %v547 = vunpack.c.l.b16 %v513
    %v548 = vunpack.c.l.b16 %v514
    %v549 = vunpack.c.l.b16 %v515
    %v550 = vunpack.c.l.b16 %v516
    %v551 = vunpack.c.l.b16 %v517
    %v552 = vunpack.c.l.b16 %v518
    %v553 = vunpack.c.l.b16 %v519
    %v554 = vunpack.c.l.b16 %v520
    %v555 = vpack.c.b16 %v540, %v539
    %v556 = vpack.c.b16 %v542, %v541
    %v557 = vpack.c.b16 %v544, %v543
    %v558 = vpack.c.b16 %v546, %v545
    %v559 = vpack.c.b16 %v548, %v547
    %v560 = vpack.c.b16 %v550, %v549
    %v561 = vpack.c.b16 %v552, %v551
    %v562 = vpack.c.b16 %v554, %v553
    %571 = vmatpush.bf16.msra.mxu0 %v562
    %572 = vmatpush.bf16.msra.mxu0 %v561
    %573 = vmatpush.bf16.msra.mxu0 %v560
    %574 = vmatpush.bf16.msra.mxu0 %v559
    %575 = vmatpush.bf16.msra.mxu0 %v558
    %576 = vmatpush.bf16.msra.mxu0 %v557
    %577 = vmatpush.bf16.msra.mxu0 %v556
    %578 = vmatpush.bf16.msra.mxu0 %v555
    %579 = vmatmul.bf16.gmra.mxu0 %v503
    %v580 = vpop.f32.mrf.mxu0
    %v581 = vadd.f32 %v522, %v580
    %v582 = vpop.f32.mrf.mxu0
    %583 = vdwg.mxu0
    %v584 = vmax.f32 %v581, 0.0
    %v585 = vpack.c.bf16 %v584, %v584
    %v586 = vld [vmem:[#allocation8] sm:$0xf]
    %v587 = vld [vmem:[#allocation8 + $0x4] sm:$0xf]
    %v588 = vld [vmem:[#allocation8 + $0x8] sm:$0xf]
    %v589 = vld [vmem:[#allocation8 + $0xc] sm:$0xf]
    %v590 = vld [vmem:[#allocation8 + $0x10] sm:$0xf]
    %v591 = vld [vmem:[#allocation8 + $0x14] sm:$0xf]
    %v592 = vld [vmem:[#allocation8 + $0x18] sm:$0xf]
    %v593 = vld [vmem:[#allocation8 + $0x1c] sm:$0xf]
    %v594 = vld [vmem:[#allocation8 + $0x20] sm:$0xf]
    %v595 = vld [vmem:[#allocation8 + $0x24] sm:$0xf]
    %v596 = vld [vmem:[#allocation8 + $0x28] sm:$0xf]
    %v597 = vld [vmem:[#allocation8 + $0x2c] sm:$0xf]
    %v598 = vld [vmem:[#allocation8 + $0x30] sm:$0xf]
    %v599 = vld [vmem:[#allocation8 + $0x34] sm:$0xf]
    %v600 = vld [vmem:[#allocation8 + $0x38] sm:$0xf]
    %v601 = vld [vmem:[#allocation8 + $0x3c] sm:$0xf]
    %v602 = vld [vmem:[#allocation10 + $0x6] sm:$0x1]
    %v603 = vperm.slane %v602, 0
    %v620 = vunpack.c.l.b16 %v586
    %v621 = vunpack.c.l.b16 %v587
    %v622 = vunpack.c.l.b16 %v588
    %v623 = vunpack.c.l.b16 %v589
    %v624 = vunpack.c.l.b16 %v590
    %v625 = vunpack.c.l.b16 %v591
    %v626 = vunpack.c.l.b16 %v592
    %v627 = vunpack.c.l.b16 %v593
    %v628 = vunpack.c.l.b16 %v594
    %v629 = vunpack.c.l.b16 %v595
    %v630 = vunpack.c.l.b16 %v596
    %v631 = vunpack.c.l.b16 %v597
    %v632 = vunpack.c.l.b16 %v598
    %v633 = vunpack.c.l.b16 %v599
    %v634 = vunpack.c.l.b16 %v600
    %v635 = vunpack.c.l.b16 %v601
    %v636 = vpack.c.b16 %v621, %v620
    %v637 = vpack.c.b16 %v623, %v622
    %v638 = vpack.c.b16 %v625, %v624
    %v639 = vpack.c.b16 %v627, %v626
    %v640 = vpack.c.b16 %v629, %v628
    %v641 = vpack.c.b16 %v631, %v630
    %v642 = vpack.c.b16 %v633, %v632
    %v643 = vpack.c.b16 %v635, %v634
    %652 = vmatpush.bf16.msra.mxu0 %v643
    %653 = vmatpush.bf16.msra.mxu0 %v642
    %654 = vmatpush.bf16.msra.mxu0 %v641
    %655 = vmatpush.bf16.msra.mxu0 %v640
    %656 = vmatpush.bf16.msra.mxu0 %v639
    %657 = vmatpush.bf16.msra.mxu0 %v638
    %658 = vmatpush.bf16.msra.mxu0 %v637
    %659 = vmatpush.bf16.msra.mxu0 %v636
    %660 = vmatmul.bf16.gmra.mxu0 %v585
    %v661 = vpop.f32.mrf.mxu0
    %v662 = vadd.f32 %v603, %v661
    %v663 = vpop.f32.mrf.mxu0
    %664 = vdwg.mxu0
    %v665 = vlaneseq
    %v666 = vand.u32 %v665, 127
    %vm667 = vcmp.lt.s32.totalorder %v666, 2
    %v668 = vsel %vm667, %v662, -1e+30
    %669 = vmax.xlane.f32.xlu0 %v668
    %v670 = vpop.xlane.xlu0 %669
    %v671 = vsub.f32 %v668, %v670
    %v672 = vmul.f32 %v671, 1.442695
    %v673 = vpow.pop %v672
    %674 = vadd.xlane.f32.xlu0 %v673
    %v675 = vpop.xlane.xlu0 %674
    %v676 = vlog2.pop %v675
    %v677 = vmul.f32 %v676, 0.6931472
    %v678 = vsub.f32 %v671, %v677
    %679 = vst [vmem:[#allocation11] sm:$0xff] %v678
    // Predicated region
    $region42: #{tpu_custom_call.1} parent=1 // pred_check
      _
    $region43: #{tpu_custom_call.1} parent=1 // pred_check_branch
      %681 = sbr.rel (0) target = $region45
    $region44: #{tpu_custom_call.1} parent=1 // pred_region
      %683 = vsyncadd [#allocation4], 0
      %s685 = sshll.u32 [#allocation11], 4
      %s686 = int_to_ptr.vmem [resolvable:$true] %s685
      %s687 = sshll.u32 %s5, 4
      %s688 = int_to_ptr.hbm [resolvable:$true] %s687
      %690 = dma.vmem_to_hbm [thread:$0]  %s686, 128, %s688, [#allocation4]
    $region45: #{tpu_custom_call.1} parent=1 // pred_fallthru
      _
    // Predicated region
    $region46: #{tpu_custom_call.1} parent=1 // pred_check
      _
    $region47: #{tpu_custom_call.1} parent=1 // pred_check_branch
      %692 = sbr.rel (0) target = $region49
    $region48: #{tpu_custom_call.1} parent=1 // pred_region
      %694 = dma.done [#allocation4], 128
    $region49: #{tpu_custom_call.1} parent=1 // pred_fallthru
      _
    %695 = vsyncpa [#allocation3], 1
    %696 = vsyncpa [#allocation6], 1
    %697 = vsyncpa [#allocation9], 1
    %698 = vsyncpa [#allocation4], 1

// kernel: tpu_custom_call.1
$region0: #{tpu_custom_call.1}
  #allocation0 [shape = 'u32[]', space=smem, size = 0x4, offset = 0x4, fixed_abs, tag = 'smem constant byte address 0x4 - core index']
  #allocation1 [shape = 'u32[72,128]{1,0:T(1,128)}', space=vmem, size = 0x9000, scoped, tag = 'internal scratch']
  %s0 = inlined_call_operand.hbm [shape: bf16[8,128], index: 0, kind: input, shape index: {}]
  %s1 = inlined_call_operand.hbm [shape: bf16[128,128], index: 1, kind: input, shape index: {}]
  %s2 = inlined_call_operand.hbm [shape: bf16[5,128,128], index: 2, kind: input, shape index: {}]
  %s3 = inlined_call_operand.hbm [shape: bf16[128,128], index: 3, kind: input, shape index: {}]
  %s4 = inlined_call_operand.hbm [shape: f32[8,128], index: 4, kind: input, shape index: {}]
  %s5 = inlined_call_operand.hbm [shape: f32[8,128], index: 5, kind: output, shape index: {}]
  %s6 = sld [smem:[#allocation0]]
  $region50: #{tpu_custom_call.1} parent=0
    _
  %s8 = ssub.s32 1, %s6
  %s9 = scalar_select 0, %s8, %s6
  $region1: #{tpu_custom_call.1} parent=0
    #allocation2 [shape = 'u8[2048]{0}', space=vmem, size = 0x800, scoped, tag = 'input window, operand 0, single buffered']
    #allocation3 [shape = 's32[1]{0}', space=sflag, size = 0x4, scoped, tag = 'scoped memory for tpu_custom_call.1']
    #allocation4 [shape = 's32[1]{0}', space=sflag, size = 0x4, scoped, tag = 'scoped memory for tpu_custom_call.1']
    #allocation5 [shape = 'u8[32768]{0}', space=vmem, size = 0x8000, scoped, tag = 'input window, operand 1, single buffered']
    #allocation6 [shape = 's32[1]{0}', space=sflag, size = 0x4, scoped, tag = 'scoped memory for tpu_custom_call.1']
    #allocation7 [shape = 'u8[163840]{0}', space=vmem, size = 0x28000, scoped, tag = 'input window, operand 2, single buffered']
    #allocation8 [shape = 'u8[32768]{0}', space=vmem, size = 0x8000, scoped, tag = 'input window, operand 3, single buffered']
    #allocation9 [shape = 's32[1]{0}', space=sflag, size = 0x4, scoped, tag = 'scoped memory for tpu_custom_call.1']
    #allocation10 [shape = 'u8[4096]{0}', space=vmem, size = 0x1000, scoped, tag = 'input window, operand 4, single buffered']
    #allocation11 [shape = 'u8[4096]{0}', space=vmem, size = 0x1000, scoped, tag = 'output window, operand 0, single buffered']
    %10 = vsyncpa [#allocation3], 0
    %11 = vsyncpa [#allocation6], 0
    %12 = vsyncpa [#allocation9], 0
    %13 = vsyncpa [#allocation4], 0
    // Predicated region
    $region2: #{tpu_custom_call.1} parent=1 // pred_check
      _
    $region3: #{tpu_custom_call.1} parent=1 // pred_check_branch
      %15 = sbr.rel (0) target = $region5
    $region4: #{tpu_custom_call.1} parent=1 // pred_region
      %17 = vsyncadd [#allocation3], 0
      %s19 = sshll.u32 %s0, 4
      %s20 = int_to_ptr.hbm [resolvable:$true] %s19
      %s21 = sshll.u32 [#allocation2], 4
      %s22 = int_to_ptr.vmem [resolvable:$true] %s21
      %24 = dma.hbm_to_vmem [thread:$0]  %s20, 64, %s22, [#allocation3]
    $region5: #{tpu_custom_call.1} parent=1 // pred_fallthru
      _
    // Predicated region
    $region6: #{tpu_custom_call.1} parent=1 // pred_check
      _
    $region7: #{tpu_custom_call.1} parent=1 // pred_check_branch
      %26 = sbr.rel (0) target = $region9
    $region8: #{tpu_custom_call.1} parent=1 // pred_region
      %28 = vsyncadd [#allocation6], 0
      %s29 = sshll.u32 %s1, 4
      %s30 = int_to_ptr.hbm [resolvable:$true] %s29
      %s31 = sshll.u32 [#allocation5], 4
      %s32 = int_to_ptr.vmem [resolvable:$true] %s31
      %37 = dma.hbm_to_vmem [thread:$0]  %s30, 1024, %s32, [#allocation6], 64, 64, 4
    $region9: #{tpu_custom_call.1} parent=1 // pred_fallthru
      _
    // Predicated region
    $region10: #{tpu_custom_call.1} parent=1 // pred_check
      _
    $region11: #{tpu_custom_call.1} parent=1 // pred_check_branch
      %39 = sbr.rel (0) target = $region13
    $region12: #{tpu_custom_call.1} parent=1 // pred_region
      %41 = vsyncadd [#allocation6], 0
      %s42 = sshll.u32 %s2, 4
      %s43 = int_to_ptr.hbm [resolvable:$true] %s42
      %s44 = sshll.u32 [#allocation7], 4
      %s45 = int_to_ptr.vmem [resolvable:$true] %s44
      %50 = dma.hbm_to_vmem [thread:$0]  %s43, 5120, %s45, [#allocation6], 64, 64, 4
    $region13: #{tpu_custom_call.1} parent=1 // pred_fallthru
      _
    // Predicated region
    $region14: #{tpu_custom_call.1} parent=1 // pred_check
      _
    $region15: #{tpu_custom_call.1} parent=1 // pred_check_branch
      %52 = sbr.rel (0) target = $region17
    $region16: #{tpu_custom_call.1} parent=1 // pred_region
      %54 = vsyncadd [#allocation9], 0
      %s55 = sshll.u32 %s3, 4
      %s56 = int_to_ptr.hbm [resolvable:$true] %s55
      %s57 = sshll.u32 [#allocation8], 4
      %s58 = int_to_ptr.vmem [resolvable:$true] %s57
      %63 = dma.hbm_to_vmem [thread:$0]  %s56, 1024, %s58, [#allocation9], 64, 64, 4
    $region17: #{tpu_custom_call.1} parent=1 // pred_fallthru
      _
    // Predicated region
    $region18: #{tpu_custom_call.1} parent=1 // pred_check
      _
    $region19: #{tpu_custom_call.1} parent=1 // pred_check_branch
      %65 = sbr.rel (0) target = $region21
    $region20: #{tpu_custom_call.1} parent=1 // pred_region
      %67 = vsyncadd [#allocation9], 0
      %s69 = sshll.u32 %s4, 4
      %s70 = int_to_ptr.hbm [resolvable:$true] %s69
      %s71 = sshll.u32 [#allocation10], 4
      %s72 = int_to_ptr.vmem [resolvable:$true] %s71
      %74 = dma.hbm_to_vmem [thread:$0]  %s70, 128, %s72, [#allocation9]
    $region21: #{tpu_custom_call.1} parent=1 // pred_fallthru
      _
    // Predicated region
    $region22: #{tpu_custom_call.1} parent=1 // pred_check
      _
    $region23: #{tpu_custom_call.1} parent=1 // pred_check_branch
      %76 = sbr.rel (0) target = $region25
    $region24: #{tpu_custom_call.1} parent=1 // pred_region
      %78 = dma.done [#allocation3], 64
    $region25: #{tpu_custom_call.1} parent=1 // pred_fallthru
      _
    // Predicated region
    $region26: #{tpu_custom_call.1} parent=1 // pred_check
      _
    $region27: #{tpu_custom_call.1} parent=1 // pred_check_branch
      %80 = sbr.rel (0) target = $region29
    $region28: #{tpu_custom_call.1} parent=1 // pred_region
      %82 = dma.done [#allocation6], 1024
    $region29: #{tpu_custom_call.1} parent=1 // pred_fallthru
      _
    // Predicated region
    $region30: #{tpu_custom_call.1} parent=1 // pred_check
      _
    $region31: #{tpu_custom_call.1} parent=1 // pred_check_branch
      %84 = sbr.rel (0) target = $region33
    $region32: #{tpu_custom_call.1} parent=1 // pred_region
      %86 = dma.done [#allocation6], 5120
    $region33: #{tpu_custom_call.1} parent=1 // pred_fallthru
      _
    // Predicated region
    $region34: #{tpu_custom_call.1} parent=1 // pred_check
      _
    $region35: #{tpu_custom_call.1} parent=1 // pred_check_branch
      %88 = sbr.rel (0) target = $region37
    $region36: #{tpu_custom_call.1} parent=1 // pred_region
      %90 = dma.done [#allocation9], 1024
    $region37: #{tpu_custom_call.1} parent=1 // pred_fallthru
      _
    // Predicated region
    $region38: #{tpu_custom_call.1} parent=1 // pred_check
      _
    $region39: #{tpu_custom_call.1} parent=1 // pred_check_branch
      %92 = sbr.rel (0) target = $region41
    $region40: #{tpu_custom_call.1} parent=1 // pred_region
      %94 = dma.done [#allocation9], 128
    $region41: #{tpu_custom_call.1} parent=1 // pred_fallthru
      _
    %v95 = vld [vmem:[#allocation2] sm:$0xf]
    %v96 = vld [vmem:[#allocation5] sm:$0xf]
    %v97 = vld [vmem:[#allocation5 + $0x4] sm:$0xf]
    %v98 = vld [vmem:[#allocation5 + $0x8] sm:$0xf]
    %v99 = vld [vmem:[#allocation5 + $0xc] sm:$0xf]
    %v100 = vld [vmem:[#allocation5 + $0x10] sm:$0xf]
    %v101 = vld [vmem:[#allocation5 + $0x14] sm:$0xf]
    %v102 = vld [vmem:[#allocation5 + $0x18] sm:$0xf]
    %v103 = vld [vmem:[#allocation5 + $0x1c] sm:$0xf]
    %v104 = vld [vmem:[#allocation5 + $0x20] sm:$0xf]
    %v105 = vld [vmem:[#allocation5 + $0x24] sm:$0xf]
    %v106 = vld [vmem:[#allocation5 + $0x28] sm:$0xf]
    %v107 = vld [vmem:[#allocation5 + $0x2c] sm:$0xf]
    %v108 = vld [vmem:[#allocation5 + $0x30] sm:$0xf]
    %v109 = vld [vmem:[#allocation5 + $0x34] sm:$0xf]
    %v110 = vld [vmem:[#allocation5 + $0x38] sm:$0xf]
    %v111 = vld [vmem:[#allocation5 + $0x3c] sm:$0xf]
    %v112 = vld [vmem:[#allocation10] sm:$0x1]
    %v113 = vperm.slane %v112, 0
    %v130 = vunpack.c.l.b16 %v96
    %v131 = vunpack.c.l.b16 %v97
    %v132 = vunpack.c.l.b16 %v98
    %v133 = vunpack.c.l.b16 %v99
    %v134 = vunpack.c.l.b16 %v100
    %v135 = vunpack.c.l.b16 %v101
    %v136 = vunpack.c.l.b16 %v102
    %v137 = vunpack.c.l.b16 %v103
    %v138 = vunpack.c.l.b16 %v104
    %v139 = vunpack.c.l.b16 %v105
    %v140 = vunpack.c.l.b16 %v106
    %v141 = vunpack.c.l.b16 %v107
    %v142 = vunpack.c.l.b16 %v108
    %v143 = vunpack.c.l.b16 %v109
    %v144 = vunpack.c.l.b16 %v110
    %v145 = vunpack.c.l.b16 %v111
    %v146 = vpack.c.b16 %v131, %v130
    %v147 = vpack.c.b16 %v133, %v132
    %v148 = vpack.c.b16 %v135, %v134
    %v149 = vpack.c.b16 %v137, %v136
    %v150 = vpack.c.b16 %v139, %v138
    %v151 = vpack.c.b16 %v141, %v140
    %v152 = vpack.c.b16 %v143, %v142
    %v153 = vpack.c.b16 %v145, %v144
    %162 = vmatpush.bf16.msra.mxu0 %v153
    %163 = vmatpush.bf16.msra.mxu0 %v152
    %164 = vmatpush.bf16.msra.mxu0 %v151
    %165 = vmatpush.bf16.msra.mxu0 %v150
    %166 = vmatpush.bf16.msra.mxu0 %v149
    %167 = vmatpush.bf16.msra.mxu0 %v148
    %168 = vmatpush.bf16.msra.mxu0 %v147
    %169 = vmatpush.bf16.msra.mxu0 %v146
    %170 = vmatmul.bf16.gmra.mxu0 %v95
    %v171 = vpop.f32.mrf.mxu0
    %v172 = vadd.f32 %v113, %v171
    %v173 = vpop.f32.mrf.mxu0
    %174 = vdwg.mxu0
    %v175 = vmax.f32 %v172, 0.0
    %v176 = vpack.c.bf16 %v175, %v175
    %v177 = vld [vmem:[#allocation7] sm:$0xf]
    %v178 = vld [vmem:[#allocation7 + $0x4] sm:$0xf]
    %v179 = vld [vmem:[#allocation7 + $0x8] sm:$0xf]
    %v180 = vld [vmem:[#allocation7 + $0xc] sm:$0xf]
    %v181 = vld [vmem:[#allocation7 + $0x10] sm:$0xf]
    %v182 = vld [vmem:[#allocation7 + $0x14] sm:$0xf]
    %v183 = vld [vmem:[#allocation7 + $0x18] sm:$0xf]
    %v184 = vld [vmem:[#allocation7 + $0x1c] sm:$0xf]
    %v185 = vld [vmem:[#allocation7 + $0x20] sm:$0xf]
    %v186 = vld [vmem:[#allocation7 + $0x24] sm:$0xf]
    %v187 = vld [vmem:[#allocation7 + $0x28] sm:$0xf]
    %v188 = vld [vmem:[#allocation7 + $0x2c] sm:$0xf]
    %v189 = vld [vmem:[#allocation7 + $0x30] sm:$0xf]
    %v190 = vld [vmem:[#allocation7 + $0x34] sm:$0xf]
    %v191 = vld [vmem:[#allocation7 + $0x38] sm:$0xf]
    %v192 = vld [vmem:[#allocation7 + $0x3c] sm:$0xf]
    %v193 = vld [vmem:[#allocation10 + $0x1] sm:$0x1]
    %v194 = vperm.slane %v193, 0
    %v211 = vunpack.c.l.b16 %v177
    %v212 = vunpack.c.l.b16 %v178
    %v213 = vunpack.c.l.b16 %v179
    %v214 = vunpack.c.l.b16 %v180
    %v215 = vunpack.c.l.b16 %v181
    %v216 = vunpack.c.l.b16 %v182
    %v217 = vunpack.c.l.b16 %v183
    %v218 = vunpack.c.l.b16 %v184
    %v219 = vunpack.c.l.b16 %v185
    %v220 = vunpack.c.l.b16 %v186
    %v221 = vunpack.c.l.b16 %v187
    %v222 = vunpack.c.l.b16 %v188
    %v223 = vunpack.c.l.b16 %v189
    %v224 = vunpack.c.l.b16 %v190
    %v225 = vunpack.c.l.b16 %v191
    %v226 = vunpack.c.l.b16 %v192
    %v227 = vpack.c.b16 %v212, %v211
    %v228 = vpack.c.b16 %v214, %v213
    %v229 = vpack.c.b16 %v216, %v215
    %v230 = vpack.c.b16 %v218, %v217
    %v231 = vpack.c.b16 %v220, %v219
    %v232 = vpack.c.b16 %v222, %v221
    %v233 = vpack.c.b16 %v224, %v223
    %v234 = vpack.c.b16 %v226, %v225
    %243 = vmatpush.bf16.msra.mxu0 %v234
    %244 = vmatpush.bf16.msra.mxu0 %v233
    %245 = vmatpush.bf16.msra.mxu0 %v232
    %246 = vmatpush.bf16.msra.mxu0 %v231
    %247 = vmatpush.bf16.msra.mxu0 %v230
    %248 = vmatpush.bf16.msra.mxu0 %v229
    %249 = vmatpush.bf16.msra.mxu0 %v228
    %250 = vmatpush.bf16.msra.mxu0 %v227
    %251 = vmatmul.bf16.gmra.mxu0 %v176
    %v252 = vpop.f32.mrf.mxu0
    %v253 = vadd.f32 %v194, %v252
    %v254 = vpop.f32.mrf.mxu0
    %255 = vdwg.mxu0
    %v256 = vmax.f32 %v253, 0.0
    %v257 = vpack.c.bf16 %v256, %v256
    %s258 = scalar_lea.vmem [#allocation7], 64
    %v259 = vld [vmem:[%s258] sm:$0xf]
    %v260 = vld [vmem:[%s258 + $0x4] sm:$0xf]
    %v261 = vld [vmem:[%s258 + $0x8] sm:$0xf]
    %v262 = vld [vmem:[%s258 + $0xc] sm:$0xf]
    %v263 = vld [vmem:[%s258 + $0x10] sm:$0xf]
    %v264 = vld [vmem:[%s258 + $0x14] sm:$0xf]
    %v265 = vld [vmem:[%s258 + $0x18] sm:$0xf]
    %v266 = vld [vmem:[%s258 + $0x1c] sm:$0xf]
    %v267 = vld [vmem:[%s258 + $0x20] sm:$0xf]
    %v268 = vld [vmem:[%s258 + $0x24] sm:$0xf]
    %v269 = vld [vmem:[%s258 + $0x28] sm:$0xf]
    %v270 = vld [vmem:[%s258 + $0x2c] sm:$0xf]
    %v271 = vld [vmem:[%s258 + $0x30] sm:$0xf]
    %v272 = vld [vmem:[%s258 + $0x34] sm:$0xf]
    %v273 = vld [vmem:[%s258 + $0x38] sm:$0xf]
    %v274 = vld [vmem:[%s258 + $0x3c] sm:$0xf]
    %v275 = vld [vmem:[#allocation10 + $0x2] sm:$0x1]
    %v276 = vperm.slane %v275, 0
    %v293 = vunpack.c.l.b16 %v259
    %v294 = vunpack.c.l.b16 %v260
    %v295 = vunpack.c.l.b16 %v261
    %v296 = vunpack.c.l.b16 %v262
    %v297 = vunpack.c.l.b16 %v263
    %v298 = vunpack.c.l.b16 %v264
    %v299 = vunpack.c.l.b16 %v265
    %v300 = vunpack.c.l.b16 %v266
    %v301 = vunpack.c.l.b16 %v267
    %v302 = vunpack.c.l.b16 %v268
    %v303 = vunpack.c.l.b16 %v269
    %v304 = vunpack.c.l.b16 %v270
    %v305 = vunpack.c.l.b16 %v271
    %v306 = vunpack.c.l.b16 %v272
    %v307 = vunpack.c.l.b16 %v273
    %v308 = vunpack.c.l.b16 %v274
    %v309 = vpack.c.b16 %v294, %v293
    %v310 = vpack.c.b16 %v296, %v295
    %v311 = vpack.c.b16 %v298, %v297
    %v312 = vpack.c.b16 %v300, %v299
    %v313 = vpack.c.b16 %v302, %v301
    %v314 = vpack.c.b16 %v304, %v303
    %v315 = vpack.c.b16 %v306, %v305
    %v316 = vpack.c.b16 %v308, %v307
    %325 = vmatpush.bf16.msra.mxu0 %v316
    %326 = vmatpush.bf16.msra.mxu0 %v315
    %327 = vmatpush.bf16.msra.mxu0 %v314
    %328 = vmatpush.bf16.msra.mxu0 %v313
    %329 = vmatpush.bf16.msra.mxu0 %v312
    %330 = vmatpush.bf16.msra.mxu0 %v311
    %331 = vmatpush.bf16.msra.mxu0 %v310
    %332 = vmatpush.bf16.msra.mxu0 %v309
    %333 = vmatmul.bf16.gmra.mxu0 %v257
    %v334 = vpop.f32.mrf.mxu0
    %v335 = vadd.f32 %v276, %v334
    %v336 = vpop.f32.mrf.mxu0
    %337 = vdwg.mxu0
    %v338 = vmax.f32 %v335, 0.0
    %v339 = vpack.c.bf16 %v338, %v338
    %s340 = scalar_lea.vmem [#allocation7], 128
    %v341 = vld [vmem:[%s340] sm:$0xf]
    %v342 = vld [vmem:[%s340 + $0x4] sm:$0xf]
    %v343 = vld [vmem:[%s340 + $0x8] sm:$0xf]
    %v344 = vld [vmem:[%s340 + $0xc] sm:$0xf]
    %v345 = vld [vmem:[%s340 + $0x10] sm:$0xf]
    %v346 = vld [vmem:[%s340 + $0x14] sm:$0xf]
    %v347 = vld [vmem:[%s340 + $0x18] sm:$0xf]
    %v348 = vld [vmem:[%s340 + $0x1c] sm:$0xf]
    %v349 = vld [vmem:[%s340 + $0x20] sm:$0xf]
    %v350 = vld [vmem:[%s340 + $0x24] sm:$0xf]
    %v351 = vld [vmem:[%s340 + $0x28] sm:$0xf]
    %v352 = vld [vmem:[%s340 + $0x2c] sm:$0xf]
    %v353 = vld [vmem:[%s340 + $0x30] sm:$0xf]
    %v354 = vld [vmem:[%s340 + $0x34] sm:$0xf]
    %v355 = vld [vmem:[%s340 + $0x38] sm:$0xf]
    %v356 = vld [vmem:[%s340 + $0x3c] sm:$0xf]
    %v357 = vld [vmem:[#allocation10 + $0x3] sm:$0x1]
    %v358 = vperm.slane %v357, 0
    %v375 = vunpack.c.l.b16 %v341
    %v376 = vunpack.c.l.b16 %v342
    %v377 = vunpack.c.l.b16 %v343
    %v378 = vunpack.c.l.b16 %v344
    %v379 = vunpack.c.l.b16 %v345
    %v380 = vunpack.c.l.b16 %v346
    %v381 = vunpack.c.l.b16 %v347
    %v382 = vunpack.c.l.b16 %v348
    %v383 = vunpack.c.l.b16 %v349
    %v384 = vunpack.c.l.b16 %v350
    %v385 = vunpack.c.l.b16 %v351
    %v386 = vunpack.c.l.b16 %v352
    %v387 = vunpack.c.l.b16 %v353
    %v388 = vunpack.c.l.b16 %v354
    %v389 = vunpack.c.l.b16 %v355
    %v390 = vunpack.c.l.b16 %v356
    %v391 = vpack.c.b16 %v376, %v375
    %v392 = vpack.c.b16 %v378, %v377
    %v393 = vpack.c.b16 %v380, %v379
    %v394 = vpack.c.b16 %v382, %v381
    %v395 = vpack.c.b16 %v384, %v383
    %v396 = vpack.c.b16 %v386, %v385
    %v397 = vpack.c.b16 %v388, %v387
    %v398 = vpack.c.b16 %v390, %v389
    %407 = vmatpush.bf16.msra.mxu0 %v398
    %408 = vmatpush.bf16.msra.mxu0 %v397
    %409 = vmatpush.bf16.msra.mxu0 %v396
    %410 = vmatpush.bf16.msra.mxu0 %v395
    %411 = vmatpush.bf16.msra.mxu0 %v394
    %412 = vmatpush.bf16.msra.mxu0 %v393
    %413 = vmatpush.bf16.msra.mxu0 %v392
    %414 = vmatpush.bf16.msra.mxu0 %v391
    %415 = vmatmul.bf16.gmra.mxu0 %v339
    %v416 = vpop.f32.mrf.mxu0
    %v417 = vadd.f32 %v358, %v416
    %v418 = vpop.f32.mrf.mxu0
    %419 = vdwg.mxu0
    %v420 = vmax.f32 %v417, 0.0
    %v421 = vpack.c.bf16 %v420, %v420
    %s422 = scalar_lea.vmem [#allocation7], 192
    %v423 = vld [vmem:[%s422] sm:$0xf]
    %v424 = vld [vmem:[%s422 + $0x4] sm:$0xf]
    %v425 = vld [vmem:[%s422 + $0x8] sm:$0xf]
    %v426 = vld [vmem:[%s422 + $0xc] sm:$0xf]
    %v427 = vld [vmem:[%s422 + $0x10] sm:$0xf]
    %v428 = vld [vmem:[%s422 + $0x14] sm:$0xf]
    %v429 = vld [vmem:[%s422 + $0x18] sm:$0xf]
    %v430 = vld [vmem:[%s422 + $0x1c] sm:$0xf]
    %v431 = vld [vmem:[%s422 + $0x20] sm:$0xf]
    %v432 = vld [vmem:[%s422 + $0x24] sm:$0xf]
    %v433 = vld [vmem:[%s422 + $0x28] sm:$0xf]
    %v434 = vld [vmem:[%s422 + $0x2c] sm:$0xf]
    %v435 = vld [vmem:[%s422 + $0x30] sm:$0xf]
    %v436 = vld [vmem:[%s422 + $0x34] sm:$0xf]
    %v437 = vld [vmem:[%s422 + $0x38] sm:$0xf]
    %v438 = vld [vmem:[%s422 + $0x3c] sm:$0xf]
    %v439 = vld [vmem:[#allocation10 + $0x4] sm:$0x1]
    %v440 = vperm.slane %v439, 0
    %v457 = vunpack.c.l.b16 %v423
    %v458 = vunpack.c.l.b16 %v424
    %v459 = vunpack.c.l.b16 %v425
    %v460 = vunpack.c.l.b16 %v426
    %v461 = vunpack.c.l.b16 %v427
    %v462 = vunpack.c.l.b16 %v428
    %v463 = vunpack.c.l.b16 %v429
    %v464 = vunpack.c.l.b16 %v430
    %v465 = vunpack.c.l.b16 %v431
    %v466 = vunpack.c.l.b16 %v432
    %v467 = vunpack.c.l.b16 %v433
    %v468 = vunpack.c.l.b16 %v434
    %v469 = vunpack.c.l.b16 %v435
    %v470 = vunpack.c.l.b16 %v436
    %v471 = vunpack.c.l.b16 %v437
    %v472 = vunpack.c.l.b16 %v438
    %v473 = vpack.c.b16 %v458, %v457
    %v474 = vpack.c.b16 %v460, %v459
    %v475 = vpack.c.b16 %v462, %v461
    %v476 = vpack.c.b16 %v464, %v463
    %v477 = vpack.c.b16 %v466, %v465
    %v478 = vpack.c.b16 %v468, %v467
    %v479 = vpack.c.b16 %v470, %v469
    %v480 = vpack.c.b16 %v472, %v471
    %489 = vmatpush.bf16.msra.mxu0 %v480
    %490 = vmatpush.bf16.msra.mxu0 %v479
    %491 = vmatpush.bf16.msra.mxu0 %v478
    %492 = vmatpush.bf16.msra.mxu0 %v477
    %493 = vmatpush.bf16.msra.mxu0 %v476
    %494 = vmatpush.bf16.msra.mxu0 %v475
    %495 = vmatpush.bf16.msra.mxu0 %v474
    %496 = vmatpush.bf16.msra.mxu0 %v473
    %497 = vmatmul.bf16.gmra.mxu0 %v421
    %v498 = vpop.f32.mrf.mxu0
    %v499 = vadd.f32 %v440, %v498
    %v500 = vpop.f32.mrf.mxu0
    %501 = vdwg.mxu0
    %v502 = vmax.f32 %v499, 0.0
    %v503 = vpack.c.bf16 %v502, %v502
    %s504 = scalar_lea.vmem [#allocation7], 256
    %v505 = vld [vmem:[%s504] sm:$0xf]
    %v506 = vld [vmem:[%s504 + $0x4] sm:$0xf]
    %v507 = vld [vmem:[%s504 + $0x8] sm:$0xf]
    %v508 = vld [vmem:[%s504 + $0xc] sm:$0xf]
    %v509 = vld [vmem:[%s504 + $0x10] sm:$0xf]
    %v510 = vld [vmem:[%s504 + $0x14] sm:$0xf]
    %v511 = vld [vmem:[%s504 + $0x18] sm:$0xf]
    %v512 = vld [vmem:[%s504 + $0x1c] sm:$0xf]
    %v513 = vld [vmem:[%s504 + $0x20] sm:$0xf]
    %v514 = vld [vmem:[%s504 + $0x24] sm:$0xf]
    %v515 = vld [vmem:[%s504 + $0x28] sm:$0xf]
    %v516 = vld [vmem:[%s504 + $0x2c] sm:$0xf]
    %v517 = vld [vmem:[%s504 + $0x30] sm:$0xf]
    %v518 = vld [vmem:[%s504 + $0x34] sm:$0xf]
    %v519 = vld [vmem:[%s504 + $0x38] sm:$0xf]
    %v520 = vld [vmem:[%s504 + $0x3c] sm:$0xf]
    %v521 = vld [vmem:[#allocation10 + $0x5] sm:$0x1]
    %v522 = vperm.slane %v521, 0
    %v539 = vunpack.c.l.b16 %v505
    %v540 = vunpack.c.l.b16 %v506
    %v541 = vunpack.c.l.b16 %v507
    %v542 = vunpack.c.l.b16 %v508
    %v543 = vunpack.c.l.b16 %v509
    %v544 = vunpack.c.l.b16 %v510
    %v545 = vunpack.c.l.b16 %v511
    %v546 = vunpack.c.l.b16 %v512
    %v547 = vunpack.c.l.b16 %v513
    %v548 = vunpack.c.l.b16 %v514
    %v549 = vunpack.c.l.b16 %v515
    %v550 = vunpack.c.l.b16 %v516
    %v551 = vunpack.c.l.b16 %v517
    %v552 = vunpack.c.l.b16 %v518
    %v553 = vunpack.c.l.b16 %v519
    %v554 = vunpack.c.l.b16 %v520
    %v555 = vpack.c.b16 %v540, %v539
    %v556 = vpack.c.b16 %v542, %v541
    %v557 = vpack.c.b16 %v544, %v543
    %v558 = vpack.c.b16 %v546, %v545
    %v559 = vpack.c.b16 %v548, %v547
    %v560 = vpack.c.b16 %v550, %v549
    %v561 = vpack.c.b16 %v552, %v551
    %v562 = vpack.c.b16 %v554, %v553
    %571 = vmatpush.bf16.msra.mxu0 %v562
    %572 = vmatpush.bf16.msra.mxu0 %v561
    %573 = vmatpush.bf16.msra.mxu0 %v560
    %574 = vmatpush.bf16.msra.mxu0 %v559
    %575 = vmatpush.bf16.msra.mxu0 %v558
    %576 = vmatpush.bf16.msra.mxu0 %v557
    %577 = vmatpush.bf16.msra.mxu0 %v556
    %578 = vmatpush.bf16.msra.mxu0 %v555
    %579 = vmatmul.bf16.gmra.mxu0 %v503
    %v580 = vpop.f32.mrf.mxu0
    %v581 = vadd.f32 %v522, %v580
    %v582 = vpop.f32.mrf.mxu0
    %583 = vdwg.mxu0
    %v584 = vmax.f32 %v581, 0.0
    %v585 = vpack.c.bf16 %v584, %v584
    %v586 = vld [vmem:[#allocation8] sm:$0xf]
    %v587 = vld [vmem:[#allocation8 + $0x4] sm:$0xf]
    %v588 = vld [vmem:[#allocation8 + $0x8] sm:$0xf]
    %v589 = vld [vmem:[#allocation8 + $0xc] sm:$0xf]
    %v590 = vld [vmem:[#allocation8 + $0x10] sm:$0xf]
    %v591 = vld [vmem:[#allocation8 + $0x14] sm:$0xf]
    %v592 = vld [vmem:[#allocation8 + $0x18] sm:$0xf]
    %v593 = vld [vmem:[#allocation8 + $0x1c] sm:$0xf]
    %v594 = vld [vmem:[#allocation8 + $0x20] sm:$0xf]
    %v595 = vld [vmem:[#allocation8 + $0x24] sm:$0xf]
    %v596 = vld [vmem:[#allocation8 + $0x28] sm:$0xf]
    %v597 = vld [vmem:[#allocation8 + $0x2c] sm:$0xf]
    %v598 = vld [vmem:[#allocation8 + $0x30] sm:$0xf]
    %v599 = vld [vmem:[#allocation8 + $0x34] sm:$0xf]
    %v600 = vld [vmem:[#allocation8 + $0x38] sm:$0xf]
    %v601 = vld [vmem:[#allocation8 + $0x3c] sm:$0xf]
    %v602 = vld [vmem:[#allocation10 + $0x6] sm:$0x1]
    %v603 = vperm.slane %v602, 0
    %v620 = vunpack.c.l.b16 %v586
    %v621 = vunpack.c.l.b16 %v587
    %v622 = vunpack.c.l.b16 %v588
    %v623 = vunpack.c.l.b16 %v589
    %v624 = vunpack.c.l.b16 %v590
    %v625 = vunpack.c.l.b16 %v591
    %v626 = vunpack.c.l.b16 %v592
    %v627 = vunpack.c.l.b16 %v593
    %v628 = vunpack.c.l.b16 %v594
    %v629 = vunpack.c.l.b16 %v595
    %v630 = vunpack.c.l.b16 %v596
    %v631 = vunpack.c.l.b16 %v597
    %v632 = vunpack.c.l.b16 %v598
    %v633 = vunpack.c.l.b16 %v599
    %v634 = vunpack.c.l.b16 %v600
    %v635 = vunpack.c.l.b16 %v601
    %v636 = vpack.c.b16 %v621, %v620
    %v637 = vpack.c.b16 %v623, %v622
    %v638 = vpack.c.b16 %v625, %v624
    %v639 = vpack.c.b16 %v627, %v626
    %v640 = vpack.c.b16 %v629, %v628
    %v641 = vpack.c.b16 %v631, %v630
    %v642 = vpack.c.b16 %v633, %v632
    %v643 = vpack.c.b16 %v635, %v634
    %652 = vmatpush.bf16.msra.mxu0 %v643
    %653 = vmatpush.bf16.msra.mxu0 %v642
    %654 = vmatpush.bf16.msra.mxu0 %v641
    %655 = vmatpush.bf16.msra.mxu0 %v640
    %656 = vmatpush.bf16.msra.mxu0 %v639
    %657 = vmatpush.bf16.msra.mxu0 %v638
    %658 = vmatpush.bf16.msra.mxu0 %v637
    %659 = vmatpush.bf16.msra.mxu0 %v636
    %660 = vmatmul.bf16.gmra.mxu0 %v585
    %v661 = vpop.f32.mrf.mxu0
    %v662 = vadd.f32 %v603, %v661
    %v663 = vpop.f32.mrf.mxu0
    %664 = vdwg.mxu0
    %v665 = vlaneseq
    %v666 = vand.u32 %v665, 127
    %vm667 = vcmp.lt.s32.totalorder %v666, 2
    %v668 = vsel %vm667, %v662, -1e+30
    %669 = vmax.xlane.f32.xlu0 %v668
    %v670 = vpop.xlane.xlu0 %669
    %v671 = vsub.f32 %v668, %v670
    %v672 = vmul.f32 %v671, 1.442695
    %v673 = vpow.pop %v672
    %674 = vadd.xlane.f32.xlu0 %v673
    %v675 = vpop.xlane.xlu0 %674
    %v676 = vlog2.pop %v675
    %v677 = vmul.f32 %v676, 0.6931472
    %v678 = vsub.f32 %v671, %v677
    %679 = vst [vmem:[#allocation11] sm:$0xff] %v678
    // Predicated region
    $region42: #{tpu_custom_call.1} parent=1 // pred_check
      _
    $region43: #{tpu_custom_call.1} parent=1 // pred_check_branch
      %681 = sbr.rel (0) target = $region45
    $region44: #{tpu_custom_call.1} parent=1 // pred_region
      %683 = vsyncadd [#allocation4], 0
      %s685 = sshll.u32 [#allocation11], 4
      %s686 = int_to_ptr.vmem [resolvable:$true] %s685
      %s687 = sshll.u32 %s5, 4
      %s688 = int_to_ptr.hbm [resolvable:$true] %s687
      %690 = dma.vmem_to_hbm [thread:$0]  %s686, 128, %s688, [#allocation4]
    $region45: #{tpu_custom_call.1} parent=1 // pred_fallthru
      _
    // Predicated region
    $region46: #{tpu_custom_call.1} parent=1 // pred_check
      _
    $region47: #{tpu_custom_call.1} parent=1 // pred_check_branch
      %692 = sbr.rel (0) target = $region49
    $region48: #{tpu_custom_call.1} parent=1 // pred_region
      %694 = dma.done [#allocation4], 128
    $region49: #{tpu_custom_call.1} parent=1 // pred_fallthru
      _
    %695 = vsyncpa [#allocation3], 1
    %696 = vsyncpa [#allocation6], 1
    %697 = vsyncpa [#allocation9], 1
    %698 = vsyncpa [#allocation4], 1

</llo_original>
